<compile_context>
chip_gen: v7x
topology: tpu7x:2x2x1
jax: 0.10.0
libtpu: 0.0.40
codegen_flags: <defaults>
</compile_context>

<pallas_src>
import math

import jax
import jax.numpy as jnp
from jax import lax
from jax.experimental import pallas as pl
from jax.experimental.pallas import tpu as pltpu

Z_MIN = 0.001
Z_MAX = 0.1
DELTA_T = 1.0  # the module hardcodes delta_t = 1; it is folded into the gate slab

# Rows of the packed (16, H) gate / initial-state slab (sublane-aligned for f32).
_ROW_UZ = 0      # Ucap * z_u
_ROW_OMZU = 1    # 1 - z_u
_ROW_UCAP = 2    # Ucap (clamp min and facilitation drive; delta_t == 1 folded)
_ROW_ZX = 3      # z_x
_ROW_OMZX = 4    # 1 - z_x
_ROW_ZH = 5      # z_h
_ROW_OMZH = 6    # 1 - z_h
_ROW_H0 = 8      # initial h
_ROW_U0 = 9      # initial U
_ROW_X0 = 10     # initial X
_SLAB_ROWS = 16


def _stp_fused_kernel(pxb_ref, slab_ref, wT_ref,      # inputs
                      hseq_ref, ux_ref,                # outputs
                      h_sc, U_sc, X_sc):               # VMEM state scratch
    """One (batch_group, time_block) grid point of the fused STPCell('poor') loop."""
    tb = pl.program_id(1)
    n_tb = pl.num_programs(1)
    bb, H = h_sc.shape
    tt = hseq_ref.shape[0]
    f32 = jnp.float32

    slab = slab_ref[...]                               # (16, H), tiny & resident

    def row(r):
        return jnp.broadcast_to(slab[r:r + 1, :], (bb, H))

    @pl.when(tb == 0)
    def _init():
        h_sc[...] = row(_ROW_H0)
        U_sc[...] = row(_ROW_U0)
        X_sc[...] = row(_ROW_X0)

    # Parameter-only gate values precomputed in the wrapper; broadcast ONCE per grid
    # step so the unrolled time loop body contains no broadcast_in_dim / sigmoid on
    # parameters.
    uz, omzu, ucap = row(_ROW_UZ), row(_ROW_OMZU), row(_ROW_UCAP)
    zx, omzx = row(_ROW_ZX), row(_ROW_OMZX)
    zh, omzh = row(_ROW_ZH), row(_ROW_OMZH)

    wT = wT_ref[...]                                   # (H, H) resident weights

    def step(i, carry):
        h, U_prev, X_prev = carry
        # facilitation variable U  (delta_t == 1 folded into uz / ucap rows)
        U = uz + omzu * U_prev + ucap * (1.0 - U_prev) * h
        U = jnp.clip(U, ucap, 1.0)     # torch.clamp(min=Ucap.repeat, max=ones)
        # depression variable X
        X = zx + omzx * X_prev - U * X_prev * h
        # hidden state: recurrent matmul on the MXU; p @ x_t + b arrives precomputed
        # per step via the pxb stream.
        pre = jnp.dot((U * X * h).astype(wT.dtype), wT,
                      preferred_element_type=f32)
        pre = pre + pxb_ref[i].astype(f32)
        h_new = omzh * h + zh * jax.nn.sigmoid(pre)
        hseq_ref[i] = h_new            # per-step h in the module's (B, H) layout
        return h_new, U, X

    h, U, X = lax.fori_loop(0, tt, step,
                            (h_sc[...], U_sc[...], X_sc[...]), unroll=True)

    # Store the carried state once per TT timesteps (not once per timestep).
    h_sc[...] = h
    U_sc[...] = U
    X_sc[...] = X

    # Final synaptic state only needs to hit the output block after the last
    # time block of this batch group.
    @pl.when(tb == n_tb - 1)
    def _finalize():
        ux_ref[0] = U
        ux_ref[1] = X


def stp_cell_forward_seq(x_seq, h0, U0, X0, params, e_h, *,
                         batch_block=None, time_block=8,
                         matmul_dtype=jnp.bfloat16):
    """Run STPCell('poor') over all timesteps of x_seq in a single pallas_call.

    x_seq : (T, I, B)  -- per-step x in the layout the PyTorch forward expects.
    h0, U0, X0 : (H, 1) initial state (the module's __init__ values).
    batch_block : rows per batch group (keep == B on single-TC v5e/v6e; use B//2 or
        smaller on dual-TC v7x so the "parallel" grid axis feeds both cores).
    time_block : timesteps processed per grid step (amortizes grid overhead).
    matmul_dtype : MXU operand dtype for the recurrent matmul / pxb stream
        (bf16 default for perf; f32 for bit-accurate verification).
    Returns (h_seq (T, B, H), U (H, B), X (H, B)).
    """
    T, I, B = x_seq.shape
    H = params["w"].shape[0]
    f32 = jnp.float32

    if batch_block is None:
        batch_block = B
    bb = batch_block
    assert B % bb == 0
    assert bb % 8 == 0 or bb == B, "batch_block must be a multiple of 8 (f32 sublane)"
    num_groups = B // bb

    # Largest divisor of T that is <= time_block: keeps the grid exact (no padding),
    # so the final-step U/X written back really are step T-1's values.
    tt = max(1, min(int(time_block), T))
    while T % tt:
        tt -= 1
    num_tb = T // tt

    use_f32 = jnp.dtype(matmul_dtype) == jnp.dtype(jnp.float32)

    # ---- parameter-only gates, computed ONCE in XLA and packed into one slab ----
    sig = jax.nn.sigmoid
    c_u = params["c_u"][:, 0].astype(f32)
    c_U = params["c_U"][:, 0].astype(f32)
    c_x = params["c_x"][:, 0].astype(f32)
    c_h = params["c_h"][:, 0].astype(f32)
    z_u = Z_MIN + (Z_MAX - Z_MIN) * sig(c_u)
    ucap = 0.9 * sig(c_U)
    z_x = Z_MIN + (Z_MAX - Z_MIN) * sig(c_x)
    # e_h enters as traced data, so changing it does not retrace/recompile.
    z_h = 0.01 + (jnp.asarray(e_h, f32) - 0.01) * sig(c_h)
    zeros = jnp.zeros((H,), f32)
    slab = jnp.stack([
        ucap * z_u,                # _ROW_UZ
        1.0 - z_u,                 # _ROW_OMZU
        ucap,                      # _ROW_UCAP
        z_x,                       # _ROW_ZX
        1.0 - z_x,                 # _ROW_OMZX
        z_h,                       # _ROW_ZH
        1.0 - z_h,                 # _ROW_OMZH
        zeros,                     # pad
        h0[:, 0].astype(f32),      # _ROW_H0
        U0[:, 0].astype(f32),      # _ROW_U0
        X0[:, 0].astype(f32),      # _ROW_X0
        zeros, zeros, zeros, zeros, zeros,   # pad to 16 sublanes
    ], axis=0)                     # (16, H)

    # ---- state-independent input projection p @ x_t + b for ALL timesteps ----
    b_row = params["b"][:, 0][None, None, :].astype(f32)
    if use_f32:
        pxb = jnp.einsum("hi,tib->tbh",
                         params["p"].astype(f32), x_seq.astype(f32),
                         precision=jax.lax.Precision.HIGHEST) + b_row
        stream_dtype = f32
    else:
        pxb = jnp.einsum("hi,tib->tbh",
                         params["p"].astype(matmul_dtype),
                         x_seq.astype(matmul_dtype),
                         preferred_element_type=f32) + b_row
        # Stream pxb in the narrow dtype when the block stays sublane-aligned;
        # this halves the only recurring HBM read of the sequential loop.
        sub = 8 * (4 // jnp.dtype(matmul_dtype).itemsize)
        stream_dtype = matmul_dtype if (bb == B or bb % sub == 0) else f32
    pxb = pxb.astype(stream_dtype)                                   # (T, B, H)

    wT = params["w"].T.astype(matmul_dtype)                          # (H, H)

    # ---- explicit VMEM budget (double-buffered streams + resident weights) ----
    s_sz = jnp.dtype(stream_dtype).itemsize
    w_sz = jnp.dtype(matmul_dtype).itemsize
    vmem_est = (2 * tt * bb * H * s_sz        # pxb stream blocks
                + 2 * _SLAB_ROWS * H * 4      # gate/init slab
                + 2 * H * H * w_sz            # resident w^T
                + 2 * tt * bb * H * 4         # h_seq writeback blocks
                + 2 * 2 * bb * H * 4          # final U/X block
                + 3 * bb * H * 4)             # h/U/X state scratch
    vmem_limit = int(min(64 * 1024 * 1024, max(2 * vmem_est + (2 << 20), 16 << 20)))

    h_seq, ux = pl.pallas_call(
        _stp_fused_kernel,
        out_shape=(jax.ShapeDtypeStruct((T, B, H), f32),
                   jax.ShapeDtypeStruct((2, B, H), f32)),
        grid_spec=pltpu.PrefetchScalarGridSpec(
            num_scalar_prefetch=0,
            grid=(num_groups, num_tb),
            in_specs=[
                pl.BlockSpec((tt, bb, H), lambda g, t: (t, g, 0)),       # pxb stream
                pl.BlockSpec((_SLAB_ROWS, H), lambda g, t: (0, 0)),      # gate slab
                pl.BlockSpec((H, H), lambda g, t: (0, 0)),               # w^T resident
            ],
            out_specs=(
                pl.BlockSpec((tt, bb, H), lambda g, t: (t, g, 0)),       # h per block
                pl.BlockSpec((2, bb, H), lambda g, t: (0, g, 0)),        # final U, X
            ),
            scratch_shapes=[
                pltpu.VMEM((bb, H), f32),   # h state
                pltpu.VMEM((bb, H), f32),   # U state
                pltpu.VMEM((bb, H), f32),   # X state
            ],
        ),
        compiler_params=pltpu.CompilerParams(
            dimension_semantics=("parallel", "arbitrary"),
            vmem_limit_bytes=vmem_limit),
    )(pxb, slab, wT)

    # Back to the module's (H, B) layout for the synaptic state.
    return h_seq, ux[0].T, ux[1].T


def _reference_seq(x_seq, h0, U0, X0, params, e_h):
    """Plain-JAX f32 mirror of driving the PyTorch 'poor' forward over x_seq."""
    sig = jax.nn.sigmoid
    hp = jax.lax.Precision.HIGHEST
    z_u = Z_MIN + (Z_MAX - Z_MIN) * sig(params["c_u"])
    Ucap = 0.9 * sig(params["c_U"])
    z_x = Z_MIN + (Z_MAX - Z_MIN) * sig(params["c_x"])
    z_h = 0.01 + (e_h - 0.01) * sig(params["c_h"])
    h, U, X = h0, U0, X0
    hs = []
    for t in range(x_seq.shape[0]):
        x = x_seq[t]                                   # (I, B)
        B = x.shape[1]
        U = Ucap * z_u + (1.0 - z_u) * U + DELTA_T * Ucap * (1.0 - U) * h
        U = jnp.clip(jnp.broadcast_to(U, (U.shape[0], B)), Ucap, 1.0)
        X = z_x + (1.0 - z_x) * X - DELTA_T * U * X * h
        pre = (jnp.matmul(params["w"], U * X * h, precision=hp)
               + jnp.matmul(params["p"], x, precision=hp) + params["b"])
        h = (1.0 - z_h) * h + z_h * sig(pre)
        hs.append(h.T)
    return jnp.stack(hs, axis=0), U, X


def init_params(key, input_size, hidden_size):
    """Deterministic init matching STPCell.__init__ ('poor')."""
    k_w, k_p, k_b = jax.random.split(key, 3)
    lim_h = 1.0 / math.sqrt(hidden_size)
    lim_i = 1.0 / math.sqrt(input_size)
    return {
        # c_* params are explicitly zeroed by the reference init loop
        "c_x": jnp.zeros((hidden_size, 1), jnp.float32),
        "c_u": jnp.zeros((hidden_size, 1), jnp.float32),
        "c_U": jnp.zeros((hidden_size, 1), jnp.float32),
        "c_h": jnp.zeros((hidden_size, 1), jnp.float32),
        "w": jax.random.uniform(k_w, (hidden_size, hidden_size), jnp.float32,
                                minval=-lim_h, maxval=lim_h),
        "p": jax.random.uniform(k_p, (hidden_size, input_size), jnp.float32,
                                minval=-lim_i, maxval=lim_i),
        "b": jax.random.uniform(k_b, (hidden_size, 1), jnp.float32,
                                minval=-1.0, maxval=1.0),
    }


if __name__ == "__main__":
    INPUT_SIZE = 4
    HIDDEN_SIZE = 128     # lane-dense: last dim of every block is a multiple of 128
    BATCH = 16
    SEQ_LEN = 16
    E_H = 0.5

    key = jax.random.PRNGKey(0)
    k_param, k_x = jax.random.split(key)
    params = init_params(k_param, INPUT_SIZE, HIDDEN_SIZE)

    # x_seq is (T, input_size, batch); see layout comment above.
    x_seq = jax.random.uniform(k_x, (SEQ_LEN, INPUT_SIZE, BATCH), jnp.float32)

    # module initial state: h_t = zeros, U = 0.9, X = ones (each (H, 1))
    h0 = jnp.zeros((HIDDEN_SIZE, 1), jnp.float32)
    U0 = jnp.full((HIDDEN_SIZE, 1), 0.9, jnp.float32)
    X0 = jnp.ones((HIDDEN_SIZE, 1), jnp.float32)

    h_ref, U_ref, X_ref = _reference_seq(x_seq, h0, U0, X0, params, E_H)

    # (1) f32 verification config: tight check; 2 batch groups exercise the
    #     "parallel" grid axis; time_block=8 -> 2 time blocks exercise state carry.
    h_seq, U_fin, X_fin = stp_cell_forward_seq(
        x_seq, h0, U0, X0, params, E_H,
        batch_block=8, time_block=8, matmul_dtype=jnp.float32)
    jax.block_until_ready((h_seq, U_fin, X_fin))
    assert h_seq.shape == (SEQ_LEN, BATCH, HIDDEN_SIZE)
    assert U_fin.shape == (HIDDEN_SIZE, BATCH) and X_fin.shape == (HIDDEN_SIZE, BATCH)
    assert jnp.allclose(h_seq, h_ref, rtol=1e-4, atol=1e-4)
    assert jnp.allclose(U_fin, U_ref, rtol=1e-4, atol=1e-4)
    assert jnp.allclose(X_fin, X_ref, rtol=1e-4, atol=1e-4)

    # (2) default perf config: bf16 MXU operands + bf16 pxb stream, single batch
    #     group (single-TensorCore default).  Loose tolerance: bf16 rounding
    #     compounds over the 16-step recurrence.
    h_b16, U_b16, X_b16 = stp_cell_forward_seq(
        x_seq, h0, U0, X0, params, E_H,
        batch_block=None, time_block=8, matmul_dtype=jnp.bfloat16)
    jax.block_until_ready((h_b16, U_b16, X_b16))
    assert h_b16.shape == (SEQ_LEN, BATCH, HIDDEN_SIZE)
    assert jnp.allclose(h_b16, h_ref, rtol=5e-2, atol=2e-2)
    assert jnp.allclose(U_b16, U_ref, rtol=5e-2, atol=2e-2)
    assert jnp.allclose(X_b16, X_ref, rtol=5e-2, atol=2e-2)

    print("KERNEL_OK")
</pallas_src>

<mosaic_0001>
module attributes {stable_mosaic.version = 11 : i64} {
  func.func @_stp_fused_kernel(%arg0: i32, %arg1: i32, %arg2: memref<8x8x128xf32, #tpu.memory_space<vmem>>, %arg3: memref<16x128xf32, #tpu.memory_space<vmem>>, %arg4: memref<128x128xf32, #tpu.memory_space<vmem>>, %arg5: memref<8x8x128xf32, #tpu.memory_space<vmem>>, %arg6: memref<2x8x128xf32, #tpu.memory_space<vmem>>, %arg7: memref<8x128xf32, #tpu.memory_space<vmem>>, %arg8: memref<8x128xf32, #tpu.memory_space<vmem>>, %arg9: memref<8x128xf32, #tpu.memory_space<vmem>>) attributes {dimension_semantics = [#tpu.dimension_semantics<parallel>, #tpu.dimension_semantics<arbitrary>], iteration_bounds = array<i64: 2, 2>, scalar_prefetch = 0 : i64, scratch_operands = 3 : i64, tpu.core_type = #tpu.core_type<tc>, window_params = [{transform_indices = @transform_0, window_bounds = array<i64: 8, 8, 128>}, {pipeline_mode = #tpu.pipeline_mode<synchronous>, transform_indices = @transform_1, window_bounds = array<i64: 16, 128>}, {pipeline_mode = #tpu.pipeline_mode<synchronous>, transform_indices = @transform_2, window_bounds = array<i64: 128, 128>}, {transform_indices = @transform_3, window_bounds = array<i64: 8, 8, 128>}, {transform_indices = @transform_4, window_bounds = array<i64: 2, 8, 128>}]} {
    %c0 = arith.constant 0 : index
    %c0_0 = arith.constant 0 : index
    %0 = vector.load %arg3[%c0, %c0_0] : memref<16x128xf32, #tpu.memory_space<vmem>>, vector<16x128xf32>
    %c0_i32 = arith.constant 0 : i32
    %1 = arith.cmpi eq, %arg1, %c0_i32 : i32
    %2 = arith.extui %1 : i1 to i32
    %c0_i32_1 = arith.constant 0 : i32
    %3 = arith.cmpi ne, %2, %c0_i32_1 : i32
    scf.if %3 {
      %307 = vector.extract_strided_slice %0 {offsets = [8, 0], sizes = [1, 128], strides = [1, 1]} : vector<16x128xf32> to vector<1x128xf32>
      %308 = vector.shape_cast %307 : vector<1x128xf32> to vector<1x128xf32>
      %309 = vector.broadcast %308 : vector<1x128xf32> to vector<8x128xf32>
      %c0_82 = arith.constant 0 : index
      %c0_83 = arith.constant 0 : index
      %310 = vector.load %arg7[%c0_82, %c0_83] : memref<8x128xf32, #tpu.memory_space<vmem>>, vector<8x128xf32>
      tpu.vector_store %arg7[%c0_82, %c0_83], %309 {strides = array<i32>} : memref<8x128xf32, #tpu.memory_space<vmem>>, vector<8x128xf32>,
      %311 = vector.extract_strided_slice %0 {offsets = [9, 0], sizes = [1, 128], strides = [1, 1]} : vector<16x128xf32> to vector<1x128xf32>
      %312 = vector.shape_cast %311 : vector<1x128xf32> to vector<1x128xf32>
      %313 = vector.broadcast %312 : vector<1x128xf32> to vector<8x128xf32>
      %c0_84 = arith.constant 0 : index
      %c0_85 = arith.constant 0 : index
      %314 = vector.load %arg8[%c0_84, %c0_85] : memref<8x128xf32, #tpu.memory_space<vmem>>, vector<8x128xf32>
      tpu.vector_store %arg8[%c0_84, %c0_85], %313 {strides = array<i32>} : memref<8x128xf32, #tpu.memory_space<vmem>>, vector<8x128xf32>,
      %315 = vector.extract_strided_slice %0 {offsets = [10, 0], sizes = [1, 128], strides = [1, 1]} : vector<16x128xf32> to vector<1x128xf32>
      %316 = vector.shape_cast %315 : vector<1x128xf32> to vector<1x128xf32>
      %317 = vector.broadcast %316 : vector<1x128xf32> to vector<8x128xf32>
      %c0_86 = arith.constant 0 : index
      %c0_87 = arith.constant 0 : index
      %318 = vector.load %arg9[%c0_86, %c0_87] : memref<8x128xf32, #tpu.memory_space<vmem>>, vector<8x128xf32>
      tpu.vector_store %arg9[%c0_86, %c0_87], %317 {strides = array<i32>} : memref<8x128xf32, #tpu.memory_space<vmem>>, vector<8x128xf32>,
    } else {
    }
    %4 = vector.extract_strided_slice %0 {offsets = [0, 0], sizes = [1, 128], strides = [1, 1]} : vector<16x128xf32> to vector<1x128xf32>
    %5 = vector.shape_cast %4 : vector<1x128xf32> to vector<1x128xf32>
    %6 = vector.broadcast %5 : vector<1x128xf32> to vector<8x128xf32>
    %7 = vector.extract_strided_slice %0 {offsets = [1, 0], sizes = [1, 128], strides = [1, 1]} : vector<16x128xf32> to vector<1x128xf32>
    %8 = vector.shape_cast %7 : vector<1x128xf32> to vector<1x128xf32>
    %9 = vector.broadcast %8 : vector<1x128xf32> to vector<8x128xf32>
    %10 = vector.extract_strided_slice %0 {offsets = [2, 0], sizes = [1, 128], strides = [1, 1]} : vector<16x128xf32> to vector<1x128xf32>
    %11 = vector.shape_cast %10 : vector<1x128xf32> to vector<1x128xf32>
    %12 = vector.broadcast %11 : vector<1x128xf32> to vector<8x128xf32>
    %13 = vector.extract_strided_slice %0 {offsets = [3, 0], sizes = [1, 128], strides = [1, 1]} : vector<16x128xf32> to vector<1x128xf32>
    %14 = vector.shape_cast %13 : vector<1x128xf32> to vector<1x128xf32>
    %15 = vector.broadcast %14 : vector<1x128xf32> to vector<8x128xf32>
    %16 = vector.extract_strided_slice %0 {offsets = [4, 0], sizes = [1, 128], strides = [1, 1]} : vector<16x128xf32> to vector<1x128xf32>
    %17 = vector.shape_cast %16 : vector<1x128xf32> to vector<1x128xf32>
    %18 = vector.broadcast %17 : vector<1x128xf32> to vector<8x128xf32>
    %19 = vector.extract_strided_slice %0 {offsets = [5, 0], sizes = [1, 128], strides = [1, 1]} : vector<16x128xf32> to vector<1x128xf32>
    %20 = vector.shape_cast %19 : vector<1x128xf32> to vector<1x128xf32>
    %21 = vector.broadcast %20 : vector<1x128xf32> to vector<8x128xf32>
    %22 = vector.extract_strided_slice %0 {offsets = [6, 0], sizes = [1, 128], strides = [1, 1]} : vector<16x128xf32> to vector<1x128xf32>
    %23 = vector.shape_cast %22 : vector<1x128xf32> to vector<1x128xf32>
    %24 = vector.broadcast %23 : vector<1x128xf32> to vector<8x128xf32>
    %c0_2 = arith.constant 0 : index
    %c0_3 = arith.constant 0 : index
    %25 = vector.load %arg4[%c0_2, %c0_3] : memref<128x128xf32, #tpu.memory_space<vmem>>, vector<128x128xf32>
    %c0_4 = arith.constant 0 : index
    %c0_5 = arith.constant 0 : index
    %26 = vector.load %arg7[%c0_4, %c0_5] : memref<8x128xf32, #tpu.memory_space<vmem>>, vector<8x128xf32>
    %c0_6 = arith.constant 0 : index
    %c0_7 = arith.constant 0 : index
    %27 = vector.load %arg8[%c0_6, %c0_7] : memref<8x128xf32, #tpu.memory_space<vmem>>, vector<8x128xf32>
    %c0_8 = arith.constant 0 : index
    %c0_9 = arith.constant 0 : index
    %28 = vector.load %arg9[%c0_8, %c0_9] : memref<8x128xf32, #tpu.memory_space<vmem>>, vector<8x128xf32>
    %c0_i32_10 = arith.constant 0 : i32
    %29 = arith.mulf %9, %27 : vector<8x128xf32>
    %30 = arith.addf %6, %29 : vector<8x128xf32>
    %cst = arith.constant 1.000000e+00 : f32
    %31 = vector.broadcast %cst : f32 to vector<8x128xf32>
    %32 = arith.subf %31, %27 : vector<8x128xf32>
    %33 = arith.mulf %12, %32 : vector<8x128xf32>
    %34 = arith.mulf %33, %26 : vector<8x128xf32>
    %35 = arith.addf %30, %34 : vector<8x128xf32>
    %cst_11 = arith.constant 1.000000e+00 : f32
    %36 = arith.maximumf %12, %35 : vector<8x128xf32>
    %37 = vector.broadcast %cst_11 : f32 to vector<8x128xf32>
    %38 = arith.minimumf %37, %36 : vector<8x128xf32>
    %39 = arith.mulf %18, %28 : vector<8x128xf32>
    %40 = arith.addf %15, %39 : vector<8x128xf32>
    %41 = arith.mulf %38, %28 : vector<8x128xf32>
    %42 = arith.mulf %41, %26 : vector<8x128xf32>
    %43 = arith.subf %40, %42 : vector<8x128xf32>
    %44 = arith.mulf %38, %43 : vector<8x128xf32>
    %45 = arith.mulf %44, %26 : vector<8x128xf32>
    %cst_12 = arith.constant dense<0.000000e+00> : vector<8x128xf32>
    %46 = tpu.matmul %45, %25, %cst_12 {dimension_numbers = #tpu.dot_dimension_numbers<[1], [0], [0], [1], [0, 0, 1, 1], [], []>} : vector<8x128xf32>, vector<128x128xf32>, vector<8x128xf32> -> vector<8x128xf32>
    %47 = arith.index_cast %c0_i32_10 : i32 to index
    %c0_13 = arith.constant 0 : index
    %c0_14 = arith.constant 0 : index
    %48 = vector.load %arg2[%47, %c0_13, %c0_14] : memref<8x8x128xf32, #tpu.memory_space<vmem>>, vector<1x8x128xf32>
    %49 = vector.shape_cast %48 : vector<1x8x128xf32> to vector<8x128xf32>
    %50 = arith.addf %46, %49 : vector<8x128xf32>
    %51 = arith.mulf %24, %26 : vector<8x128xf32>
    %52 = arith.negf %50 : vector<8x128xf32>
    %53 = math.exp %52 : vector<8x128xf32>
    %cst_15 = arith.constant 1.000000e+00 : f32
    %54 = vector.broadcast %cst_15 : f32 to vector<8x128xf32>
    %55 = arith.addf %54, %53 : vector<8x128xf32>
    %56 = arith.divf %54, %55 : vector<8x128xf32>
    %57 = arith.mulf %21, %56 : vector<8x128xf32>
    %58 = arith.addf %51, %57 : vector<8x128xf32>
    %59 = arith.index_cast %c0_i32_10 : i32 to index
    %c0_16 = arith.constant 0 : index
    %c0_17 = arith.constant 0 : index
    %60 = vector.load %arg5[%59, %c0_16, %c0_17] : memref<8x8x128xf32, #tpu.memory_space<vmem>>, vector<1x8x128xf32>
    %61 = vector.shape_cast %60 : vector<1x8x128xf32> to vector<8x128xf32>
    %62 = vector.shape_cast %58 : vector<8x128xf32> to vector<1x8x128xf32>
    tpu.vector_store %arg5[%59, %c0_16, %c0_17], %62 {strides = array<i32>} : memref<8x8x128xf32, #tpu.memory_space<vmem>>, vector<1x8x128xf32>,
    %c1_i32 = arith.constant 1 : i32
    %63 = arith.mulf %9, %38 : vector<8x128xf32>
    %64 = arith.addf %6, %63 : vector<8x128xf32>
    %cst_18 = arith.constant 1.000000e+00 : f32
    %65 = vector.broadcast %cst_18 : f32 to vector<8x128xf32>
    %66 = arith.subf %65, %38 : vector<8x128xf32>
    %67 = arith.mulf %12, %66 : vector<8x128xf32>
    %68 = arith.mulf %67, %58 : vector<8x128xf32>
    %69 = arith.addf %64, %68 : vector<8x128xf32>
    %cst_19 = arith.constant 1.000000e+00 : f32
    %70 = arith.maximumf %12, %69 : vector<8x128xf32>
    %71 = vector.broadcast %cst_19 : f32 to vector<8x128xf32>
    %72 = arith.minimumf %71, %70 : vector<8x128xf32>
    %73 = arith.mulf %18, %43 : vector<8x128xf32>
    %74 = arith.addf %15, %73 : vector<8x128xf32>
    %75 = arith.mulf %72, %43 : vector<8x128xf32>
    %76 = arith.mulf %75, %58 : vector<8x128xf32>
    %77 = arith.subf %74, %76 : vector<8x128xf32>
    %78 = arith.mulf %72, %77 : vector<8x128xf32>
    %79 = arith.mulf %78, %58 : vector<8x128xf32>
    %cst_20 = arith.constant dense<0.000000e+00> : vector<8x128xf32>
    %80 = tpu.matmul %79, %25, %cst_20 {dimension_numbers = #tpu.dot_dimension_numbers<[1], [0], [0], [1], [0, 0, 1, 1], [], []>} : vector<8x128xf32>, vector<128x128xf32>, vector<8x128xf32> -> vector<8x128xf32>
    %81 = arith.index_cast %c1_i32 : i32 to index
    %c0_21 = arith.constant 0 : index
    %c0_22 = arith.constant 0 : index
    %82 = vector.load %arg2[%81, %c0_21, %c0_22] : memref<8x8x128xf32, #tpu.memory_space<vmem>>, vector<1x8x128xf32>
    %83 = vector.shape_cast %82 : vector<1x8x128xf32> to vector<8x128xf32>
    %84 = arith.addf %80, %83 : vector<8x128xf32>
    %85 = arith.mulf %24, %58 : vector<8x128xf32>
    %86 = arith.negf %84 : vector<8x128xf32>
    %87 = math.exp %86 : vector<8x128xf32>
    %cst_23 = arith.constant 1.000000e+00 : f32
    %88 = vector.broadcast %cst_23 : f32 to vector<8x128xf32>
    %89 = arith.addf %88, %87 : vector<8x128xf32>
    %90 = arith.divf %88, %89 : vector<8x128xf32>
    %91 = arith.mulf %21, %90 : vector<8x128xf32>
    %92 = arith.addf %85, %91 : vector<8x128xf32>
    %93 = arith.index_cast %c1_i32 : i32 to index
    %c0_24 = arith.constant 0 : index
    %c0_25 = arith.constant 0 : index
    %94 = vector.load %arg5[%93, %c0_24, %c0_25] : memref<8x8x128xf32, #tpu.memory_space<vmem>>, vector<1x8x128xf32>
    %95 = vector.shape_cast %94 : vector<1x8x128xf32> to vector<8x128xf32>
    %96 = vector.shape_cast %92 : vector<8x128xf32> to vector<1x8x128xf32>
    tpu.vector_store %arg5[%93, %c0_24, %c0_25], %96 {strides = array<i32>} : memref<8x8x128xf32, #tpu.memory_space<vmem>>, vector<1x8x128xf32>,
    %c2_i32 = arith.constant 2 : i32
    %97 = arith.mulf %9, %72 : vector<8x128xf32>
    %98 = arith.addf %6, %97 : vector<8x128xf32>
    %cst_26 = arith.constant 1.000000e+00 : f32
    %99 = vector.broadcast %cst_26 : f32 to vector<8x128xf32>
    %100 = arith.subf %99, %72 : vector<8x128xf32>
    %101 = arith.mulf %12, %100 : vector<8x128xf32>
    %102 = arith.mulf %101, %92 : vector<8x128xf32>
    %103 = arith.addf %98, %102 : vector<8x128xf32>
    %cst_27 = arith.constant 1.000000e+00 : f32
    %104 = arith.maximumf %12, %103 : vector<8x128xf32>
    %105 = vector.broadcast %cst_27 : f32 to vector<8x128xf32>
    %106 = arith.minimumf %105, %104 : vector<8x128xf32>
    %107 = arith.mulf %18, %77 : vector<8x128xf32>
    %108 = arith.addf %15, %107 : vector<8x128xf32>
    %109 = arith.mulf %106, %77 : vector<8x128xf32>
    %110 = arith.mulf %109, %92 : vector<8x128xf32>
    %111 = arith.subf %108, %110 : vector<8x128xf32>
    %112 = arith.mulf %106, %111 : vector<8x128xf32>
    %113 = arith.mulf %112, %92 : vector<8x128xf32>
    %cst_28 = arith.constant dense<0.000000e+00> : vector<8x128xf32>
    %114 = tpu.matmul %113, %25, %cst_28 {dimension_numbers = #tpu.dot_dimension_numbers<[1], [0], [0], [1], [0, 0, 1, 1], [], []>} : vector<8x128xf32>, vector<128x128xf32>, vector<8x128xf32> -> vector<8x128xf32>
    %115 = arith.index_cast %c2_i32 : i32 to index
    %c0_29 = arith.constant 0 : index
    %c0_30 = arith.constant 0 : index
    %116 = vector.load %arg2[%115, %c0_29, %c0_30] : memref<8x8x128xf32, #tpu.memory_space<vmem>>, vector<1x8x128xf32>
    %117 = vector.shape_cast %116 : vector<1x8x128xf32> to vector<8x128xf32>
    %118 = arith.addf %114, %117 : vector<8x128xf32>
    %119 = arith.mulf %24, %92 : vector<8x128xf32>
    %120 = arith.negf %118 : vector<8x128xf32>
    %121 = math.exp %120 : vector<8x128xf32>
    %cst_31 = arith.constant 1.000000e+00 : f32
    %122 = vector.broadcast %cst_31 : f32 to vector<8x128xf32>
    %123 = arith.addf %122, %121 : vector<8x128xf32>
    %124 = arith.divf %122, %123 : vector<8x128xf32>
    %125 = arith.mulf %21, %124 : vector<8x128xf32>
    %126 = arith.addf %119, %125 : vector<8x128xf32>
    %127 = arith.index_cast %c2_i32 : i32 to index
    %c0_32 = arith.constant 0 : index
    %c0_33 = arith.constant 0 : index
    %128 = vector.load %arg5[%127, %c0_32, %c0_33] : memref<8x8x128xf32, #tpu.memory_space<vmem>>, vector<1x8x128xf32>
    %129 = vector.shape_cast %128 : vector<1x8x128xf32> to vector<8x128xf32>
    %130 = vector.shape_cast %126 : vector<8x128xf32> to vector<1x8x128xf32>
    tpu.vector_store %arg5[%127, %c0_32, %c0_33], %130 {strides = array<i32>} : memref<8x8x128xf32, #tpu.memory_space<vmem>>, vector<1x8x128xf32>,
    %c3_i32 = arith.constant 3 : i32
    %131 = arith.mulf %9, %106 : vector<8x128xf32>
    %132 = arith.addf %6, %131 : vector<8x128xf32>
    %cst_34 = arith.constant 1.000000e+00 : f32
    %133 = vector.broadcast %cst_34 : f32 to vector<8x128xf32>
    %134 = arith.subf %133, %106 : vector<8x128xf32>
    %135 = arith.mulf %12, %134 : vector<8x128xf32>
    %136 = arith.mulf %135, %126 : vector<8x128xf32>
    %137 = arith.addf %132, %136 : vector<8x128xf32>
    %cst_35 = arith.constant 1.000000e+00 : f32
    %138 = arith.maximumf %12, %137 : vector<8x128xf32>
    %139 = vector.broadcast %cst_35 : f32 to vector<8x128xf32>
    %140 = arith.minimumf %139, %138 : vector<8x128xf32>
    %141 = arith.mulf %18, %111 : vector<8x128xf32>
    %142 = arith.addf %15, %141 : vector<8x128xf32>
    %143 = arith.mulf %140, %111 : vector<8x128xf32>
    %144 = arith.mulf %143, %126 : vector<8x128xf32>
    %145 = arith.subf %142, %144 : vector<8x128xf32>
    %146 = arith.mulf %140, %145 : vector<8x128xf32>
    %147 = arith.mulf %146, %126 : vector<8x128xf32>
    %cst_36 = arith.constant dense<0.000000e+00> : vector<8x128xf32>
    %148 = tpu.matmul %147, %25, %cst_36 {dimension_numbers = #tpu.dot_dimension_numbers<[1], [0], [0], [1], [0, 0, 1, 1], [], []>} : vector<8x128xf32>, vector<128x128xf32>, vector<8x128xf32> -> vector<8x128xf32>
    %149 = arith.index_cast %c3_i32 : i32 to index
    %c0_37 = arith.constant 0 : index
    %c0_38 = arith.constant 0 : index
    %150 = vector.load %arg2[%149, %c0_37, %c0_38] : memref<8x8x128xf32, #tpu.memory_space<vmem>>, vector<1x8x128xf32>
    %151 = vector.shape_cast %150 : vector<1x8x128xf32> to vector<8x128xf32>
    %152 = arith.addf %148, %151 : vector<8x128xf32>
    %153 = arith.mulf %24, %126 : vector<8x128xf32>
    %154 = arith.negf %152 : vector<8x128xf32>
    %155 = math.exp %154 : vector<8x128xf32>
    %cst_39 = arith.constant 1.000000e+00 : f32
    %156 = vector.broadcast %cst_39 : f32 to vector<8x128xf32>
    %157 = arith.addf %156, %155 : vector<8x128xf32>
    %158 = arith.divf %156, %157 : vector<8x128xf32>
    %159 = arith.mulf %21, %158 : vector<8x128xf32>
    %160 = arith.addf %153, %159 : vector<8x128xf32>
    %161 = arith.index_cast %c3_i32 : i32 to index
    %c0_40 = arith.constant 0 : index
    %c0_41 = arith.constant 0 : index
    %162 = vector.load %arg5[%161, %c0_40, %c0_41] : memref<8x8x128xf32, #tpu.memory_space<vmem>>, vector<1x8x128xf32>
    %163 = vector.shape_cast %162 : vector<1x8x128xf32> to vector<8x128xf32>
    %164 = vector.shape_cast %160 : vector<8x128xf32> to vector<1x8x128xf32>
    tpu.vector_store %arg5[%161, %c0_40, %c0_41], %164 {strides = array<i32>} : memref<8x8x128xf32, #tpu.memory_space<vmem>>, vector<1x8x128xf32>,
    %c4_i32 = arith.constant 4 : i32
    %165 = arith.mulf %9, %140 : vector<8x128xf32>
    %166 = arith.addf %6, %165 : vector<8x128xf32>
    %cst_42 = arith.constant 1.000000e+00 : f32
    %167 = vector.broadcast %cst_42 : f32 to vector<8x128xf32>
    %168 = arith.subf %167, %140 : vector<8x128xf32>
    %169 = arith.mulf %12, %168 : vector<8x128xf32>
    %170 = arith.mulf %169, %160 : vector<8x128xf32>
    %171 = arith.addf %166, %170 : vector<8x128xf32>
    %cst_43 = arith.constant 1.000000e+00 : f32
    %172 = arith.maximumf %12, %171 : vector<8x128xf32>
    %173 = vector.broadcast %cst_43 : f32 to vector<8x128xf32>
    %174 = arith.minimumf %173, %172 : vector<8x128xf32>
    %175 = arith.mulf %18, %145 : vector<8x128xf32>
    %176 = arith.addf %15, %175 : vector<8x128xf32>
    %177 = arith.mulf %174, %145 : vector<8x128xf32>
    %178 = arith.mulf %177, %160 : vector<8x128xf32>
    %179 = arith.subf %176, %178 : vector<8x128xf32>
    %180 = arith.mulf %174, %179 : vector<8x128xf32>
    %181 = arith.mulf %180, %160 : vector<8x128xf32>
    %cst_44 = arith.constant dense<0.000000e+00> : vector<8x128xf32>
    %182 = tpu.matmul %181, %25, %cst_44 {dimension_numbers = #tpu.dot_dimension_numbers<[1], [0], [0], [1], [0, 0, 1, 1], [], []>} : vector<8x128xf32>, vector<128x128xf32>, vector<8x128xf32> -> vector<8x128xf32>
    %183 = arith.index_cast %c4_i32 : i32 to index
    %c0_45 = arith.constant 0 : index
    %c0_46 = arith.constant 0 : index
    %184 = vector.load %arg2[%183, %c0_45, %c0_46] : memref<8x8x128xf32, #tpu.memory_space<vmem>>, vector<1x8x128xf32>
    %185 = vector.shape_cast %184 : vector<1x8x128xf32> to vector<8x128xf32>
    %186 = arith.addf %182, %185 : vector<8x128xf32>
    %187 = arith.mulf %24, %160 : vector<8x128xf32>
    %188 = arith.negf %186 : vector<8x128xf32>
    %189 = math.exp %188 : vector<8x128xf32>
    %cst_47 = arith.constant 1.000000e+00 : f32
    %190 = vector.broadcast %cst_47 : f32 to vector<8x128xf32>
    %191 = arith.addf %190, %189 : vector<8x128xf32>
    %192 = arith.divf %190, %191 : vector<8x128xf32>
    %193 = arith.mulf %21, %192 : vector<8x128xf32>
    %194 = arith.addf %187, %193 : vector<8x128xf32>
    %195 = arith.index_cast %c4_i32 : i32 to index
    %c0_48 = arith.constant 0 : index
    %c0_49 = arith.constant 0 : index
    %196 = vector.load %arg5[%195, %c0_48, %c0_49] : memref<8x8x128xf32, #tpu.memory_space<vmem>>, vector<1x8x128xf32>
    %197 = vector.shape_cast %196 : vector<1x8x128xf32> to vector<8x128xf32>
    %198 = vector.shape_cast %194 : vector<8x128xf32> to vector<1x8x128xf32>
    tpu.vector_store %arg5[%195, %c0_48, %c0_49], %198 {strides = array<i32>} : memref<8x8x128xf32, #tpu.memory_space<vmem>>, vector<1x8x128xf32>,
    %c5_i32 = arith.constant 5 : i32
    %199 = arith.mulf %9, %174 : vector<8x128xf32>
    %200 = arith.addf %6, %199 : vector<8x128xf32>
    %cst_50 = arith.constant 1.000000e+00 : f32
    %201 = vector.broadcast %cst_50 : f32 to vector<8x128xf32>
    %202 = arith.subf %201, %174 : vector<8x128xf32>
    %203 = arith.mulf %12, %202 : vector<8x128xf32>
    %204 = arith.mulf %203, %194 : vector<8x128xf32>
    %205 = arith.addf %200, %204 : vector<8x128xf32>
    %cst_51 = arith.constant 1.000000e+00 : f32
    %206 = arith.maximumf %12, %205 : vector<8x128xf32>
    %207 = vector.broadcast %cst_51 : f32 to vector<8x128xf32>
    %208 = arith.minimumf %207, %206 : vector<8x128xf32>
    %209 = arith.mulf %18, %179 : vector<8x128xf32>
    %210 = arith.addf %15, %209 : vector<8x128xf32>
    %211 = arith.mulf %208, %179 : vector<8x128xf32>
    %212 = arith.mulf %211, %194 : vector<8x128xf32>
    %213 = arith.subf %210, %212 : vector<8x128xf32>
    %214 = arith.mulf %208, %213 : vector<8x128xf32>
    %215 = arith.mulf %214, %194 : vector<8x128xf32>
    %cst_52 = arith.constant dense<0.000000e+00> : vector<8x128xf32>
    %216 = tpu.matmul %215, %25, %cst_52 {dimension_numbers = #tpu.dot_dimension_numbers<[1], [0], [0], [1], [0, 0, 1, 1], [], []>} : vector<8x128xf32>, vector<128x128xf32>, vector<8x128xf32> -> vector<8x128xf32>
    %217 = arith.index_cast %c5_i32 : i32 to index
    %c0_53 = arith.constant 0 : index
    %c0_54 = arith.constant 0 : index
    %218 = vector.load %arg2[%217, %c0_53, %c0_54] : memref<8x8x128xf32, #tpu.memory_space<vmem>>, vector<1x8x128xf32>
    %219 = vector.shape_cast %218 : vector<1x8x128xf32> to vector<8x128xf32>
    %220 = arith.addf %216, %219 : vector<8x128xf32>
    %221 = arith.mulf %24, %194 : vector<8x128xf32>
    %222 = arith.negf %220 : vector<8x128xf32>
    %223 = math.exp %222 : vector<8x128xf32>
    %cst_55 = arith.constant 1.000000e+00 : f32
    %224 = vector.broadcast %cst_55 : f32 to vector<8x128xf32>
    %225 = arith.addf %224, %223 : vector<8x128xf32>
    %226 = arith.divf %224, %225 : vector<8x128xf32>
    %227 = arith.mulf %21, %226 : vector<8x128xf32>
    %228 = arith.addf %221, %227 : vector<8x128xf32>
    %229 = arith.index_cast %c5_i32 : i32 to index
    %c0_56 = arith.constant 0 : index
    %c0_57 = arith.constant 0 : index
    %230 = vector.load %arg5[%229, %c0_56, %c0_57] : memref<8x8x128xf32, #tpu.memory_space<vmem>>, vector<1x8x128xf32>
    %231 = vector.shape_cast %230 : vector<1x8x128xf32> to vector<8x128xf32>
    %232 = vector.shape_cast %228 : vector<8x128xf32> to vector<1x8x128xf32>
    tpu.vector_store %arg5[%229, %c0_56, %c0_57], %232 {strides = array<i32>} : memref<8x8x128xf32, #tpu.memory_space<vmem>>, vector<1x8x128xf32>,
    %c6_i32 = arith.constant 6 : i32
    %233 = arith.mulf %9, %208 : vector<8x128xf32>
    %234 = arith.addf %6, %233 : vector<8x128xf32>
    %cst_58 = arith.constant 1.000000e+00 : f32
    %235 = vector.broadcast %cst_58 : f32 to vector<8x128xf32>
    %236 = arith.subf %235, %208 : vector<8x128xf32>
    %237 = arith.mulf %12, %236 : vector<8x128xf32>
    %238 = arith.mulf %237, %228 : vector<8x128xf32>
    %239 = arith.addf %234, %238 : vector<8x128xf32>
    %cst_59 = arith.constant 1.000000e+00 : f32
    %240 = arith.maximumf %12, %239 : vector<8x128xf32>
    %241 = vector.broadcast %cst_59 : f32 to vector<8x128xf32>
    %242 = arith.minimumf %241, %240 : vector<8x128xf32>
    %243 = arith.mulf %18, %213 : vector<8x128xf32>
    %244 = arith.addf %15, %243 : vector<8x128xf32>
    %245 = arith.mulf %242, %213 : vector<8x128xf32>
    %246 = arith.mulf %245, %228 : vector<8x128xf32>
    %247 = arith.subf %244, %246 : vector<8x128xf32>
    %248 = arith.mulf %242, %247 : vector<8x128xf32>
    %249 = arith.mulf %248, %228 : vector<8x128xf32>
    %cst_60 = arith.constant dense<0.000000e+00> : vector<8x128xf32>
    %250 = tpu.matmul %249, %25, %cst_60 {dimension_numbers = #tpu.dot_dimension_numbers<[1], [0], [0], [1], [0, 0, 1, 1], [], []>} : vector<8x128xf32>, vector<128x128xf32>, vector<8x128xf32> -> vector<8x128xf32>
    %251 = arith.index_cast %c6_i32 : i32 to index
    %c0_61 = arith.constant 0 : index
    %c0_62 = arith.constant 0 : index
    %252 = vector.load %arg2[%251, %c0_61, %c0_62] : memref<8x8x128xf32, #tpu.memory_space<vmem>>, vector<1x8x128xf32>
    %253 = vector.shape_cast %252 : vector<1x8x128xf32> to vector<8x128xf32>
    %254 = arith.addf %250, %253 : vector<8x128xf32>
    %255 = arith.mulf %24, %228 : vector<8x128xf32>
    %256 = arith.negf %254 : vector<8x128xf32>
    %257 = math.exp %256 : vector<8x128xf32>
    %cst_63 = arith.constant 1.000000e+00 : f32
    %258 = vector.broadcast %cst_63 : f32 to vector<8x128xf32>
    %259 = arith.addf %258, %257 : vector<8x128xf32>
    %260 = arith.divf %258, %259 : vector<8x128xf32>
    %261 = arith.mulf %21, %260 : vector<8x128xf32>
    %262 = arith.addf %255, %261 : vector<8x128xf32>
    %263 = arith.index_cast %c6_i32 : i32 to index
    %c0_64 = arith.constant 0 : index
    %c0_65 = arith.constant 0 : index
    %264 = vector.load %arg5[%263, %c0_64, %c0_65] : memref<8x8x128xf32, #tpu.memory_space<vmem>>, vector<1x8x128xf32>
    %265 = vector.shape_cast %264 : vector<1x8x128xf32> to vector<8x128xf32>
    %266 = vector.shape_cast %262 : vector<8x128xf32> to vector<1x8x128xf32>
    tpu.vector_store %arg5[%263, %c0_64, %c0_65], %266 {strides = array<i32>} : memref<8x8x128xf32, #tpu.memory_space<vmem>>, vector<1x8x128xf32>,
    %c7_i32 = arith.constant 7 : i32
    %267 = arith.mulf %9, %242 : vector<8x128xf32>
    %268 = arith.addf %6, %267 : vector<8x128xf32>
    %cst_66 = arith.constant 1.000000e+00 : f32
    %269 = vector.broadcast %cst_66 : f32 to vector<8x128xf32>
    %270 = arith.subf %269, %242 : vector<8x128xf32>
    %271 = arith.mulf %12, %270 : vector<8x128xf32>
    %272 = arith.mulf %271, %262 : vector<8x128xf32>
    %273 = arith.addf %268, %272 : vector<8x128xf32>
    %cst_67 = arith.constant 1.000000e+00 : f32
    %274 = arith.maximumf %12, %273 : vector<8x128xf32>
    %275 = vector.broadcast %cst_67 : f32 to vector<8x128xf32>
    %276 = arith.minimumf %275, %274 : vector<8x128xf32>
    %277 = arith.mulf %18, %247 : vector<8x128xf32>
    %278 = arith.addf %15, %277 : vector<8x128xf32>
    %279 = arith.mulf %276, %247 : vector<8x128xf32>
    %280 = arith.mulf %279, %262 : vector<8x128xf32>
    %281 = arith.subf %278, %280 : vector<8x128xf32>
    %282 = arith.mulf %276, %281 : vector<8x128xf32>
    %283 = arith.mulf %282, %262 : vector<8x128xf32>
    %cst_68 = arith.constant dense<0.000000e+00> : vector<8x128xf32>
    %284 = tpu.matmul %283, %25, %cst_68 {dimension_numbers = #tpu.dot_dimension_numbers<[1], [0], [0], [1], [0, 0, 1, 1], [], []>} : vector<8x128xf32>, vector<128x128xf32>, vector<8x128xf32> -> vector<8x128xf32>
    %285 = arith.index_cast %c7_i32 : i32 to index
    %c0_69 = arith.constant 0 : index
    %c0_70 = arith.constant 0 : index
    %286 = vector.load %arg2[%285, %c0_69, %c0_70] : memref<8x8x128xf32, #tpu.memory_space<vmem>>, vector<1x8x128xf32>
    %287 = vector.shape_cast %286 : vector<1x8x128xf32> to vector<8x128xf32>
    %288 = arith.addf %284, %287 : vector<8x128xf32>
    %289 = arith.mulf %24, %262 : vector<8x128xf32>
    %290 = arith.negf %288 : vector<8x128xf32>
    %291 = math.exp %290 : vector<8x128xf32>
    %cst_71 = arith.constant 1.000000e+00 : f32
    %292 = vector.broadcast %cst_71 : f32 to vector<8x128xf32>
    %293 = arith.addf %292, %291 : vector<8x128xf32>
    %294 = arith.divf %292, %293 : vector<8x128xf32>
    %295 = arith.mulf %21, %294 : vector<8x128xf32>
    %296 = arith.addf %289, %295 : vector<8x128xf32>
    %297 = arith.index_cast %c7_i32 : i32 to index
    %c0_72 = arith.constant 0 : index
    %c0_73 = arith.constant 0 : index
    %298 = vector.load %arg5[%297, %c0_72, %c0_73] : memref<8x8x128xf32, #tpu.memory_space<vmem>>, vector<1x8x128xf32>
    %299 = vector.shape_cast %298 : vector<1x8x128xf32> to vector<8x128xf32>
    %300 = vector.shape_cast %296 : vector<8x128xf32> to vector<1x8x128xf32>
    tpu.vector_store %arg5[%297, %c0_72, %c0_73], %300 {strides = array<i32>} : memref<8x8x128xf32, #tpu.memory_space<vmem>>, vector<1x8x128xf32>,
    %c8_i32 = arith.constant 8 : i32
    %c0_74 = arith.constant 0 : index
    %c0_75 = arith.constant 0 : index
    %301 = vector.load %arg7[%c0_74, %c0_75] : memref<8x128xf32, #tpu.memory_space<vmem>>, vector<8x128xf32>
    tpu.vector_store %arg7[%c0_74, %c0_75], %296 {strides = array<i32>} : memref<8x128xf32, #tpu.memory_space<vmem>>, vector<8x128xf32>,
    %c0_76 = arith.constant 0 : index
    %c0_77 = arith.constant 0 : index
    %302 = vector.load %arg8[%c0_76, %c0_77] : memref<8x128xf32, #tpu.memory_space<vmem>>, vector<8x128xf32>
    tpu.vector_store %arg8[%c0_76, %c0_77], %276 {strides = array<i32>} : memref<8x128xf32, #tpu.memory_space<vmem>>, vector<8x128xf32>,
    %c0_78 = arith.constant 0 : index
    %c0_79 = arith.constant 0 : index
    %303 = vector.load %arg9[%c0_78, %c0_79] : memref<8x128xf32, #tpu.memory_space<vmem>>, vector<8x128xf32>
    tpu.vector_store %arg9[%c0_78, %c0_79], %281 {strides = array<i32>} : memref<8x128xf32, #tpu.memory_space<vmem>>, vector<8x128xf32>,
    %c1_i32_80 = arith.constant 1 : i32
    %304 = arith.cmpi eq, %arg1, %c1_i32_80 : i32
    %305 = arith.extui %304 : i1 to i32
    %c0_i32_81 = arith.constant 0 : i32
    %306 = arith.cmpi ne, %305, %c0_i32_81 : i32
    scf.if %306 {
      %c0_82 = arith.constant 0 : index
      %c0_83 = arith.constant 0 : index
      %c0_84 = arith.constant 0 : index
      %307 = vector.load %arg6[%c0_82, %c0_83, %c0_84] : memref<2x8x128xf32, #tpu.memory_space<vmem>>, vector<1x8x128xf32>
      %308 = vector.shape_cast %307 : vector<1x8x128xf32> to vector<8x128xf32>
      %309 = vector.shape_cast %276 : vector<8x128xf32> to vector<1x8x128xf32>
      tpu.vector_store %arg6[%c0_82, %c0_83, %c0_84], %309 {strides = array<i32>} : memref<2x8x128xf32, #tpu.memory_space<vmem>>, vector<1x8x128xf32>,
      %c1 = arith.constant 1 : index
      %c0_85 = arith.constant 0 : index
      %c0_86 = arith.constant 0 : index
      %310 = vector.load %arg6[%c1, %c0_85, %c0_86] : memref<2x8x128xf32, #tpu.memory_space<vmem>>, vector<1x8x128xf32>
      %311 = vector.shape_cast %310 : vector<1x8x128xf32> to vector<8x128xf32>
      %312 = vector.shape_cast %281 : vector<8x128xf32> to vector<1x8x128xf32>
      tpu.vector_store %arg6[%c1, %c0_85, %c0_86], %312 {strides = array<i32>} : memref<2x8x128xf32, #tpu.memory_space<vmem>>, vector<1x8x128xf32>,
    } else {
    }
    return
  }
  func.func @transform_0(%arg0: i32, %arg1: i32) -> (i32, i32, i32) {
    %c0_i32 = arith.constant 0 : i32
    %c0_i32_0 = arith.constant 0 : i32
    return %arg1, %arg0, %c0_i32 : i32, i32, i32
  }
  func.func @transform_1(%arg0: i32, %arg1: i32) -> (i32, i32) {
    %c0_i32 = arith.constant 0 : i32
    %c0_i32_0 = arith.constant 0 : i32
    %c0_i32_1 = arith.constant 0 : i32
    return %c0_i32, %c0_i32_0 : i32, i32
  }
  func.func @transform_2(%arg0: i32, %arg1: i32) -> (i32, i32) {
    %c0_i32 = arith.constant 0 : i32
    %c0_i32_0 = arith.constant 0 : i32
    %c0_i32_1 = arith.constant 0 : i32
    return %c0_i32, %c0_i32_0 : i32, i32
  }
  func.func @transform_3(%arg0: i32, %arg1: i32) -> (i32, i32, i32) {
    %c0_i32 = arith.constant 0 : i32
    %c0_i32_0 = arith.constant 0 : i32
    return %arg1, %arg0, %c0_i32 : i32, i32, i32
  }
  func.func @transform_4(%arg0: i32, %arg1: i32) -> (i32, i32, i32) {
    %c0_i32 = arith.constant 0 : i32
    %c0_i32_0 = arith.constant 0 : i32
    %c0_i32_1 = arith.constant 0 : i32
    return %c0_i32, %arg0, %c0_i32_0 : i32, i32, i32
  }
}

</mosaic_0001>

<llo_original>
// kernel: tpu_custom_call.1
$region0: #{tpu_custom_call.1}
  #allocation0 [shape = 'u32[]', space=smem, size = 0x4, offset = 0x4, fixed_abs, tag = 'smem constant byte address 0x4 - core index']
  #allocation1 [shape = 'u32[144,128]{1,0:T(1,128)}', space=vmem, size = 0x12000, scoped, tag = 'internal scratch']
  #allocation2 [shape = 'f32[8,128]{1,0:T(8,128)}', space=vmem, size = 0x1000, scoped, tag = 'scratch operand']
  #allocation3 [shape = 'f32[8,128]{1,0:T(8,128)}', space=vmem, size = 0x1000, scoped, tag = 'scratch operand']
  #allocation4 [shape = 'f32[8,128]{1,0:T(8,128)}', space=vmem, size = 0x1000, scoped, tag = 'scratch operand']
  %s0 = inlined_call_operand.hbm [shape: f32[16,16,128], index: 0, kind: input, shape index: {}]
  %s1 = inlined_call_operand.hbm [shape: f32[16,128], index: 1, kind: input, shape index: {}]
  %s2 = inlined_call_operand.hbm [shape: f32[128,128], index: 2, kind: input, shape index: {}]
  %s3 = inlined_call_operand.hbm [shape: f32[16,16,128], index: 3, kind: output, shape index: {0}]
  %s4 = inlined_call_operand.hbm [shape: f32[2,16,128], index: 4, kind: output, shape index: {1}]
  %5 = xla_tuple %s3, %s4
  %s6 = sld [smem:[#allocation0]]
  $region73: #{tpu_custom_call.1} parent=0
    _
  %s8 = ssub.s32 1, %s6
  %s9 = scalar_select 0, %s8, %s6
  $region1: #{tpu_custom_call.1} parent=0
    #allocation5 [shape = 'u8[65536]{0}', space=vmem, size = 0x10000, scoped, tag = 'input window, operand 0']
    #allocation6 [shape = 's32[2]{0}', space=sflag, size = 0x8, scoped, tag = 'scoped memory for tpu_custom_call.1']
    #allocation7 [shape = 's32[2]{0}', space=sflag, size = 0x8, scoped, tag = 'scoped memory for tpu_custom_call.1']
    #allocation8 [shape = 'u8[8192]{0}', space=vmem, size = 0x2000, scoped, tag = 'input window, operand 1, single buffered']
    #allocation9 [shape = 's32[1]{0}', space=sflag, size = 0x4, scoped, tag = 'scoped memory for tpu_custom_call.1']
    #allocation10 [shape = 'u8[65536]{0}', space=vmem, size = 0x10000, scoped, tag = 'input window, operand 2, single buffered']
    #allocation11 [shape = 'u8[65536]{0}', space=vmem, size = 0x10000, scoped, tag = 'output window, operand 0']
    #allocation12 [shape = 'u8[16384]{0}', space=vmem, size = 0x4000, scoped, tag = 'output window, operand 1']
    #allocation13 [shape = 's32[2]{0}', space=sflag, size = 0x8, scoped, tag = 'scoped memory for tpu_custom_call.1']
    %10 = vsyncpa [#allocation6], 0
    %s11 = scalar_lea.sflag [#allocation6], 1
    %12 = vsyncpa %s11, 0
    %13 = vsyncpa [#allocation9], 0
    %14 = vsyncpa [#allocation7], 0
    %s15 = scalar_lea.sflag [#allocation7], 1
    %16 = vsyncpa %s15, 0
    %17 = vsyncpa [#allocation13], 0
    %s18 = scalar_lea.sflag [#allocation13], 1
    %19 = vsyncpa %s18, 0
    loop: start=0, step=1, limit=6
    $region2: #{tpu_custom_call.1} parent=1 // loop_pre_header
      _
    $region3: #{tpu_custom_call.1} parent=1 // loop_header
      %s21 = sphi 0, %s25
      %p22 = scmp.ge.s32.totalorder %s21, 6
      %s28 = sphi 0, %s40
      %s29 = sphi 0, %s36
      %s30 = sphi 0, %s28
      %s31 = sphi 0, %s29
      %s32 = sphi 0, %s30
      %s33 = sphi 0, %s31
      %s45 = sphi 0, %s47
      %s48 = sphi 0, %s45
      %s49 = sphi 0, %s48
      %s65 = sphi 0, %s49
      %s69 = sphi 0, %s69
      %s71 = sphi 0, %s69
      %s72 = sphi 0, %s71
      %s86 = sphi 0, %s72
      %s90 = sphi 0, %s90
      %s92 = sphi 0, %s90
      %s93 = sphi 0, %s92
      %s107 = sphi 0, %s93
      %s115 = sphi 0, %s117
      %s118 = sphi 0, %s115
      %s119 = sphi 0, %s118
      %s135 = sphi 0, %s119
      %s141 = sphi 0, %s143
      %s144 = sphi 0, %s141
      %s145 = sphi 0, %s144
      %s161 = sphi 0, %s145
    $region4: #{tpu_custom_call.1} parent=1 // loop_header_branch
      %24 = sbr.rel (%p22) target = $region8
    $region5: #{tpu_custom_call.1} parent=1 // loop_body
      %s26 = ssub.s32 %s21, 1
      %s27 = ssub.s32 %s21, 2
      %s34 = sadd.s32 1, %s29
      %p35 = scmp.ge.s32.totalorder %s34, 2
      %s36 = scalar_select %p35, 0, %s34
      %s37 = sadd.s32 1, %s28
      %s38 = scalar_select %p35, %s37, %s28
      %p39 = scmp.ge.s32.totalorder %s38, 2
      %s40 = scalar_select %p39, 0, %s38
      %s41 = ssub.s32 %s29, %s36
      %s42 = ssub.s32 %s28, %s40
      %s43 = sor.u32 %s41, %s42
      %p44 = scmp.eq.s32.totalorder %s43, 0
      %s46 = sadd.s32 %s45, 1
      %s47 = scalar_select %p44, %s45, %s46
      %p50 = pneg %p44
      %p51 = scmp.eq.s32.totalorder %s21, 3
      %p52 = por %p50, %p51
      %p53 = scmp.ne.s32.totalorder %s45, %s48
      %p54 = scmp.eq.s32.totalorder %s21, 0
      %p55 = por %p53, %p54
      %p56 = scmp.ne.s32.totalorder %s45, %s48
      %p57 = scmp.eq.s32.totalorder %s26, 3
      %p58 = por %p56, %p57
      %p59 = scmp.ne.s32.totalorder %s48, %s49
      %p60 = scmp.eq.s32.totalorder %s26, 0
      %p61 = por %p59, %p60
      %p62 = scmp.ne.s32.totalorder %s48, %s49
      %p63 = scmp.eq.s32.totalorder %s27, 3
      %p64 = por %p62, %p63
      %p66 = scmp.ne.s32.totalorder %s49, %s65
      %p67 = scmp.eq.s32.totalorder %s27, 0
      %p68 = por %p66, %p67
      %s70 = sadd.s32 %s69, 1
      %p73 = scmp.eq.s32.totalorder %s21, 3
      %p74 = scmp.ne.s32.totalorder %s69, %s71
      %p75 = scmp.eq.s32.totalorder %s21, 0
      %p76 = por %p74, %p75
      %p77 = scmp.ne.s32.totalorder %s69, %s71
      %p78 = scmp.eq.s32.totalorder %s26, 3
      %p79 = por %p77, %p78
      %p80 = scmp.ne.s32.totalorder %s71, %s72
      %p81 = scmp.eq.s32.totalorder %s26, 0
      %p82 = por %p80, %p81
      %p83 = scmp.ne.s32.totalorder %s71, %s72
      %p84 = scmp.eq.s32.totalorder %s27, 3
      %p85 = por %p83, %p84
      %p87 = scmp.ne.s32.totalorder %s72, %s86
      %p88 = scmp.eq.s32.totalorder %s27, 0
      %p89 = por %p87, %p88
      %s91 = sadd.s32 %s90, 1
      %p94 = scmp.eq.s32.totalorder %s21, 3
      %p95 = scmp.ne.s32.totalorder %s90, %s92
      %p96 = scmp.eq.s32.totalorder %s21, 0
      %p97 = por %p95, %p96
      %p98 = scmp.ne.s32.totalorder %s90, %s92
      %p99 = scmp.eq.s32.totalorder %s26, 3
      %p100 = por %p98, %p99
      %p101 = scmp.ne.s32.totalorder %s92, %s93
      %p102 = scmp.eq.s32.totalorder %s26, 0
      %p103 = por %p101, %p102
      %p104 = scmp.ne.s32.totalorder %s92, %s93
      %p105 = scmp.eq.s32.totalorder %s27, 3
      %p106 = por %p104, %p105
      %p108 = scmp.ne.s32.totalorder %s93, %s107
      %p109 = scmp.eq.s32.totalorder %s27, 0
      %p110 = por %p108, %p109
      %s111 = ssub.s32 %s29, %s36
      %s112 = ssub.s32 %s28, %s40
      %s113 = sor.u32 %s111, %s112
      %p114 = scmp.eq.s32.totalorder %s113, 0
      %s116 = sadd.s32 %s115, 1
      %s117 = scalar_select %p114, %s115, %s116
      %p120 = pneg %p114
      %p121 = scmp.eq.s32.totalorder %s21, 3
      %p122 = por %p120, %p121
      %p123 = scmp.ne.s32.totalorder %s115, %s118
      %p124 = scmp.eq.s32.totalorder %s21, 0
      %p125 = por %p123, %p124
      %p126 = scmp.ne.s32.totalorder %s115, %s118
      %p127 = scmp.eq.s32.totalorder %s26, 3
      %p128 = por %p126, %p127
      %p129 = scmp.ne.s32.totalorder %s118, %s119
      %p130 = scmp.eq.s32.totalorder %s26, 0
      %p131 = por %p129, %p130
      %p132 = scmp.ne.s32.totalorder %s118, %s119
      %p133 = scmp.eq.s32.totalorder %s27, 3
      %p134 = por %p132, %p133
      %p136 = scmp.ne.s32.totalorder %s119, %s135
      %p137 = scmp.eq.s32.totalorder %s27, 0
      %p138 = por %p136, %p137
      %s139 = ssub.s32 %s28, %s40
      %p140 = scmp.eq.s32.totalorder %s139, 0
      %s142 = sadd.s32 %s141, 1
      %s143 = scalar_select %p140, %s141, %s142
      %p146 = pneg %p140
      %p147 = scmp.eq.s32.totalorder %s21, 3
      %p148 = por %p146, %p147
      %p149 = scmp.ne.s32.totalorder %s141, %s144
      %p150 = scmp.eq.s32.totalorder %s21, 0
      %p151 = por %p149, %p150
      %p152 = scmp.ne.s32.totalorder %s141, %s144
      %p153 = scmp.eq.s32.totalorder %s26, 3
      %p154 = por %p152, %p153
      %p155 = scmp.ne.s32.totalorder %s144, %s145
      %p156 = scmp.eq.s32.totalorder %s26, 0
      %p157 = por %p155, %p156
      %p158 = scmp.ne.s32.totalorder %s144, %s145
      %p159 = scmp.eq.s32.totalorder %s27, 3
      %p160 = por %p158, %p159
      %p162 = scmp.ne.s32.totalorder %s145, %s161
      %p163 = scmp.eq.s32.totalorder %s27, 0
      %p164 = por %p162, %p163
      %p165 = scmp.le.s32.totalorder 1, %s21
      %p166 = scmp.lt.s32.totalorder %s21, 5
      %p167 = pnand %p165, %p166
      %p168 = pneg %p167
      // Predicated region
      $region9: #{tpu_custom_call.1} parent=5 // pred_check
        _
      $region10: #{tpu_custom_call.1} parent=5 // pred_check_branch
        %170 = sbr.rel (%p167) target = $region12
      $region11: #{tpu_custom_call.1} parent=5 // pred_region
        %s171 = ssub.s32 %s21, 1
        // Predicated region
        $region13: #{tpu_custom_call.1} parent=11 // pred_check
          %p172 = pneg %p82
        $region14: #{tpu_custom_call.1} parent=11 // pred_check_branch
          %174 = sbr.rel (%p172) target = $region16
        $region15: #{tpu_custom_call.1} parent=11 // pred_region
          %s176 = ssub.s32 256, 256
          %177 = vsyncadd [#allocation9], %s176
          %s178 = sshll.u32 [#allocation8], 4
          %s179 = int_to_ptr.vmem [resolvable:$true] %s178
          %184 = dma.hbm_to_vmem [thread:$0]  %s1, 256, %s179, [#allocation9], 128, 128, 8
        $region16: #{tpu_custom_call.1} parent=11 // pred_fallthru
          _
        // Predicated region
        $region17: #{tpu_custom_call.1} parent=11 // pred_check
          %p185 = pneg %p103
        $region18: #{tpu_custom_call.1} parent=11 // pred_check_branch
          %187 = sbr.rel (%p185) target = $region20
        $region19: #{tpu_custom_call.1} parent=11 // pred_region
          %s189 = ssub.s32 2048, 2048
          %190 = vsyncadd [#allocation9], %s189
          %s191 = sshll.u32 [#allocation10], 4
          %s192 = int_to_ptr.vmem [resolvable:$true] %s191
          %197 = dma.hbm_to_vmem [thread:$0]  %s2, 2048, %s192, [#allocation9], 128, 128, 8
        $region20: #{tpu_custom_call.1} parent=11 // pred_fallthru
          _
      $region12: #{tpu_custom_call.1} parent=5 // pred_fallthru
        _
      %p198 = scmp.lt.s32.totalorder %s21, 4
      // Predicated region
      $region21: #{tpu_custom_call.1} parent=5 // pred_check
        %p199 = pneg %p198
      $region22: #{tpu_custom_call.1} parent=5 // pred_check_branch
        %201 = sbr.rel (%p199) target = $region24
      $region23: #{tpu_custom_call.1} parent=5 // pred_region
        // Predicated region
        $region25: #{tpu_custom_call.1} parent=23 // pred_check
          %p202 = pneg %p55
        $region26: #{tpu_custom_call.1} parent=23 // pred_check_branch
          %204 = sbr.rel (%p202) target = $region28
        $region27: #{tpu_custom_call.1} parent=23 // pred_region
          %s205 = sand.u32 %s45, 1
          %s206 = scalar_lea.sflag [#allocation6], %s205
          %s207 = sand.u32 %s45, 1
          %s208 = smul.addr %s207, 64
          %s209 = scalar_lea.vmem [#allocation5], %s208
          %s210 = smul.u32 8, %s29
          %s212 = ssub.s32 1024, 1024
          %213 = vsyncadd %s206, %s212
          %s214 = smul.addr %s210, 2
          %s215 = sadd.s32 %s28, %s214
          %s216 = smul.addr %s215, 128
          %s217 = scalar_lea.hbm %s0, %s216
          %s218 = sshll.u32 %s209, 4
          %s219 = int_to_ptr.vmem [resolvable:$true] %s218
          %224 = dma.hbm_to_vmem [thread:$0]  %s217, 1024, %s219, %s206, 256, 128, 8
        $region28: #{tpu_custom_call.1} parent=23 // pred_fallthru
          _
      $region24: #{tpu_custom_call.1} parent=5 // pred_fallthru
        _
      %p225 = scmp.le.s32.totalorder 1, %s21
      %p226 = scmp.lt.s32.totalorder %s21, 5
      %p227 = pnand %p225, %p226
      %p228 = pneg %p227
      // Predicated region
      $region29: #{tpu_custom_call.1} parent=5 // pred_check
        _
      $region30: #{tpu_custom_call.1} parent=5 // pred_check_branch
        %230 = sbr.rel (%p227) target = $region32
      $region31: #{tpu_custom_call.1} parent=5 // pred_region
        %s231 = ssub.s32 %s21, 1
        %s232 = sand.u32 %s48, 1
        %s233 = scalar_lea.sflag [#allocation6], %s232
        %s234 = sand.u32 %s48, 1
        %s235 = smul.addr %s234, 64
        %s236 = scalar_lea.vmem [#allocation5], %s235
        // Predicated region
        $region33: #{tpu_custom_call.1} parent=31 // pred_check
          %p237 = pneg %p61
        $region34: #{tpu_custom_call.1} parent=31 // pred_check_branch
          %239 = sbr.rel (%p237) target = $region36
        $region35: #{tpu_custom_call.1} parent=31 // pred_region
          %240 = dma.done %s233, 1024
        $region36: #{tpu_custom_call.1} parent=31 // pred_fallthru
          _
        // Predicated region
        $region37: #{tpu_custom_call.1} parent=31 // pred_check
          %p241 = pneg %p82
        $region38: #{tpu_custom_call.1} parent=31 // pred_check_branch
          %243 = sbr.rel (%p241) target = $region40
        $region39: #{tpu_custom_call.1} parent=31 // pred_region
          %244 = dma.done [#allocation9], 256
        $region40: #{tpu_custom_call.1} parent=31 // pred_fallthru
          _
        // Predicated region
        $region41: #{tpu_custom_call.1} parent=31 // pred_check
          %p245 = pneg %p103
        $region42: #{tpu_custom_call.1} parent=31 // pred_check_branch
          %247 = sbr.rel (%p245) target = $region44
        $region43: #{tpu_custom_call.1} parent=31 // pred_region
          %248 = dma.done [#allocation9], 2048
        $region44: #{tpu_custom_call.1} parent=31 // pred_fallthru
          _
        %s249 = sand.u32 %s48, 1
        %s250 = scalar_lea.sflag [#allocation6], %s249
        %s251 = sand.u32 %s48, 1
        %s252 = smul.addr %s251, 64
        %s253 = scalar_lea.vmem [#allocation5], %s252
        %p254 = pneg %p61
        %p255 = pneg %p58
        %p256 = pneg %p82
        %p257 = pneg %p79
        %p258 = pneg %p103
        %p259 = pneg %p100
        %p260 = pneg %p131
        %p261 = pneg %p128
        %s262 = sand.u32 %s118, 1
        %s263 = scalar_lea.sflag [#allocation7], %s262
        %s264 = sand.u32 %s118, 1
        %s265 = smul.addr %s264, 64
        %s266 = scalar_lea.vmem [#allocation11], %s265
        %p267 = pneg %p157
        %p268 = pneg %p154
        %s269 = sand.u32 %s144, 1
        %s270 = scalar_lea.sflag [#allocation13], %s269
        %s271 = sand.u32 %s144, 1
        %s272 = smul.addr %s271, 16
        %s273 = scalar_lea.vmem [#allocation12], %s272
        %s274 = smul.u32 8, %s31
        %s275 = smul.u32 8, %s31
        %v276 = vld [vmem:[#allocation8] sm:$0xff]
        %v277 = vld [vmem:[#allocation8 + $0x8] sm:$0xff]
        %p278 = scmp.eq.s32.totalorder %s31, 0
        // Predicated region
        $region45: #{tpu_custom_call.1} parent=31 // pred_check
          %p279 = pneg %p278
        $region46: #{tpu_custom_call.1} parent=31 // pred_check_branch
          %281 = sbr.rel (%p279) target = $region48
        $region47: #{tpu_custom_call.1} parent=31 // pred_region
          %v282 = vlaneseq
          %v283 = vshrl.u32 %v282, 7
          %v284 = vsub.s32 0, %v283
          %v285 = vrot.slane %v277, %v284
          %286 = vst [vmem:[#allocation2] sm:$0xff] %v285
          %v287 = vlaneseq
          %v288 = vshrl.u32 %v287, 7
          %v289 = vsub.s32 1, %v288
          %v290 = vrot.slane %v277, %v289
          %291 = vst [vmem:[#allocation3] sm:$0xff] %v290
          %v292 = vlaneseq
          %v293 = vshrl.u32 %v292, 7
          %v294 = vsub.s32 2, %v293
          %v295 = vrot.slane %v277, %v294
          %296 = vst [vmem:[#allocation4] sm:$0xff] %v295
        $region48: #{tpu_custom_call.1} parent=31 // pred_fallthru
          _
        %v297 = vlaneseq
        %v298 = vshrl.u32 %v297, 7
        %v299 = vsub.s32 0, %v298
        %v300 = vrot.slane %v276, %v299
        %v301 = vlaneseq
        %v302 = vshrl.u32 %v301, 7
        %v303 = vsub.s32 1, %v302
        %v304 = vrot.slane %v276, %v303
        %v305 = vlaneseq
        %v306 = vshrl.u32 %v305, 7
        %v307 = vsub.s32 2, %v306
        %v308 = vrot.slane %v276, %v307
        %v309 = vlaneseq
        %v310 = vshrl.u32 %v309, 7
        %v311 = vsub.s32 3, %v310
        %v312 = vrot.slane %v276, %v311
        %v313 = vlaneseq
        %v314 = vshrl.u32 %v313, 7
        %v315 = vsub.s32 4, %v314
        %v316 = vrot.slane %v276, %v315
        %v317 = vlaneseq
        %v318 = vshrl.u32 %v317, 7
        %v319 = vsub.s32 5, %v318
        %v320 = vrot.slane %v276, %v319
        %v321 = vlaneseq
        %v322 = vshrl.u32 %v321, 7
        %v323 = vsub.s32 6, %v322
        %v324 = vrot.slane %v276, %v323
        %v325 = vld [vmem:[#allocation10] sm:$0xff]
        %v326 = vld [vmem:[#allocation10 + $0x8] sm:$0xff]
        %v327 = vld [vmem:[#allocation10 + $0x10] sm:$0xff]
        %v328 = vld [vmem:[#allocation10 + $0x18] sm:$0xff]
        %v329 = vld [vmem:[#allocation10 + $0x20] sm:$0xff]
        %v330 = vld [vmem:[#allocation10 + $0x28] sm:$0xff]
        %v331 = vld [vmem:[#allocation10 + $0x30] sm:$0xff]
        %v332 = vld [vmem:[#allocation10 + $0x38] sm:$0xff]
        %v333 = vld [vmem:[#allocation10 + $0x40] sm:$0xff]
        %v334 = vld [vmem:[#allocation10 + $0x48] sm:$0xff]
        %v335 = vld [vmem:[#allocation10 + $0x50] sm:$0xff]
        %v336 = vld [vmem:[#allocation10 + $0x58] sm:$0xff]
        %v337 = vld [vmem:[#allocation10 + $0x60] sm:$0xff]
        %v338 = vld [vmem:[#allocation10 + $0x68] sm:$0xff]
        %v339 = vld [vmem:[#allocation10 + $0x70] sm:$0xff]
        %v340 = vld [vmem:[#allocation10 + $0x78] sm:$0xff]
        %v341 = vld [vmem:[#allocation2] sm:$0xff]
        %v342 = vld [vmem:[#allocation3] sm:$0xff]
        %v343 = vld [vmem:[#allocation4] sm:$0xff]
        %v344 = vmul.f32 %v304, %v342
        %v345 = vadd.f32 %v300, %v344
        %v346 = vsub.f32 1.0, %v342
        %v347 = vmul.f32 %v308, %v346
        %v348 = vmul.f32 %v347, %v341
        %v349 = vadd.f32 %v345, %v348
        %v350 = vmax.f32 %v308, %v349
        %v351 = vmin.f32 %v350, 1.0
        %v352 = vmul.f32 %v316, %v343
        %v353 = vadd.f32 %v312, %v352
        %v354 = vmul.f32 %v351, %v343
        %v355 = vmul.f32 %v354, %v341
        %v356 = vsub.f32 %v353, %v355
        %v357 = vmul.f32 %v351, %v356
        %v358 = vmul.f32 %v357, %v341
        %v359 = vld [vmem:[%s236] sm:$0xff]
        %360 = vmatprep.subr.mxu0 0.0
        %361 = vmatpush1.msra.mxu0 %v325
        %362 = vmatprep.subr.mxu0 0.0
        %363 = vmatpush1.msra.mxu0 %v326
        %364 = vmatprep.subr.mxu0 0.0
        %365 = vmatpush1.msra.mxu0 %v327
        %366 = vmatprep.subr.mxu0 0.0
        %367 = vmatpush1.msra.mxu0 %v328
        %368 = vmatprep.subr.mxu0 0.0
        %369 = vmatpush1.msra.mxu0 %v329
        %370 = vmatprep.subr.mxu0 0.0
        %371 = vmatpush1.msra.mxu0 %v330
        %372 = vmatprep.subr.mxu0 0.0
        %373 = vmatpush1.msra.mxu0 %v331
        %374 = vmatprep.subr.mxu0 0.0
        %375 = vmatpush1.msra.mxu0 %v332
        %376 = vmatprep.subr.mxu0 0.0
        %377 = vmatpush1.msra.mxu0 %v333
        %378 = vmatprep.subr.mxu0 0.0
        %379 = vmatpush1.msra.mxu0 %v334
        %380 = vmatprep.subr.mxu0 0.0
        %381 = vmatpush1.msra.mxu0 %v335
        %382 = vmatprep.subr.mxu0 0.0
        %383 = vmatpush1.msra.mxu0 %v336
        %384 = vmatprep.subr.mxu0 0.0
        %385 = vmatpush1.msra.mxu0 %v337
        %386 = vmatprep.subr.mxu0 0.0
        %387 = vmatpush1.msra.mxu0 %v338
        %388 = vmatprep.subr.mxu0 0.0
        %389 = vmatpush1.msra.mxu0 %v339
        %390 = vmatprep.subr.mxu0 0.0
        %391 = vmatpush1.msra.mxu0 %v340
        %392 = vmatprep.subr.mxu0 0.0
        %393 = vmatpush1.msra.mxu0 0.0
        %394 = vmatprep.subr.mxu0 0.0
        %395 = vmatpush1.msra.mxu0 0.0
        %396 = vmatprep.subr.mxu0 0.0
        %397 = vmatpush1.msra.mxu0 0.0
        %398 = vmatprep.subr.mxu0 0.0
        %399 = vmatpush1.msra.mxu0 0.0
        %400 = vmatprep.subr.mxu0 0.0
        %401 = vmatpush1.msra.mxu0 0.0
        %402 = vmatprep.subr.mxu0 0.0
        %403 = vmatpush1.msra.mxu0 0.0
        %404 = vmatprep.subr.mxu0 0.0
        %405 = vmatpush1.msra.mxu0 0.0
        %406 = vmatprep.subr.mxu0 0.0
        %407 = vmatpush1.msra.mxu0 0.0
        %408 = vmatprep.subr.mxu0 0.0
        %409 = vmatpush1.msra.mxu0 0.0
        %410 = vmatprep.subr.mxu0 0.0
        %411 = vmatpush1.msra.mxu0 0.0
        %412 = vmatprep.subr.mxu0 0.0
        %413 = vmatpush1.msra.mxu0 0.0
        %414 = vmatprep.subr.mxu0 0.0
        %415 = vmatpush1.msra.mxu0 0.0
        %416 = vmatprep.subr.mxu0 0.0
        %417 = vmatpush1.msra.mxu0 0.0
        %418 = vmatprep.subr.mxu0 0.0
        %419 = vmatpush1.msra.mxu0 0.0
        %420 = vmatprep.subr.mxu0 0.0
        %421 = vmatpush1.msra.mxu0 0.0
        %422 = vmatprep.subr.mxu0 0.0
        %423 = vmatpush1.msra.mxu0 0.0
        %424 = vmatprep.mubr.f32.mxu0 0.0
        %425 = vmatmul.mubr.f32.gmra.mrb[0].mxu0 %v358
        %v426 = vpop.f32.mrb[0].mxu0
        %v427 = vadd.f32 %v359, %v426
        %v428 = vpop.f32.mrb[0].mxu0
        %429 = vdwg.mxu0
        %v430 = vmul.f32 %v324, %v341
        %v431 = vxor.u32 %v427, 2147483648
        %v432 = vmul.f32 %v431, 1.442695
        %v433 = vpow.pop %v432
        %v434 = vadd.f32 %v433, 1.0
        %v435 = vrcp.pop %v434
        %v436 = vmul.f32 1.0, %v435
        %v437 = vmul.f32 %v320, %v436
        %v438 = vadd.f32 %v430, %v437
        %439 = vst [vmem:[%s266] sm:$0xff] %v438
        %v440 = vmul.f32 %v304, %v351
        %v441 = vadd.f32 %v300, %v440
        %v442 = vsub.f32 1.0, %v351
        %v443 = vmul.f32 %v308, %v442
        %v444 = vmul.f32 %v443, %v438
        %v445 = vadd.f32 %v441, %v444
        %v446 = vmax.f32 %v308, %v445
        %v447 = vmin.f32 %v446, 1.0
        %v448 = vmul.f32 %v316, %v356
        %v449 = vadd.f32 %v312, %v448
        %v450 = vmul.f32 %v447, %v356
        %v451 = vmul.f32 %v450, %v438
        %v452 = vsub.f32 %v449, %v451
        %v453 = vmul.f32 %v447, %v452
        %v454 = vmul.f32 %v453, %v438
        %s455 = scalar_lea.vmem %s236, 8 [#allocation5]
        %v456 = vld [vmem:[%s455] sm:$0xff]
        %457 = vmatprep.subr.mxu0 0.0
        %458 = vmatpush1.msra.mxu0 %v325
        %459 = vmatprep.subr.mxu0 0.0
        %460 = vmatpush1.msra.mxu0 %v326
        %461 = vmatprep.subr.mxu0 0.0
        %462 = vmatpush1.msra.mxu0 %v327
        %463 = vmatprep.subr.mxu0 0.0
        %464 = vmatpush1.msra.mxu0 %v328
        %465 = vmatprep.subr.mxu0 0.0
        %466 = vmatpush1.msra.mxu0 %v329
        %467 = vmatprep.subr.mxu0 0.0
        %468 = vmatpush1.msra.mxu0 %v330
        %469 = vmatprep.subr.mxu0 0.0
        %470 = vmatpush1.msra.mxu0 %v331
        %471 = vmatprep.subr.mxu0 0.0
        %472 = vmatpush1.msra.mxu0 %v332
        %473 = vmatprep.subr.mxu0 0.0
        %474 = vmatpush1.msra.mxu0 %v333
        %475 = vmatprep.subr.mxu0 0.0
        %476 = vmatpush1.msra.mxu0 %v334
        %477 = vmatprep.subr.mxu0 0.0
        %478 = vmatpush1.msra.mxu0 %v335
        %479 = vmatprep.subr.mxu0 0.0
        %480 = vmatpush1.msra.mxu0 %v336
        %481 = vmatprep.subr.mxu0 0.0
        %482 = vmatpush1.msra.mxu0 %v337
        %483 = vmatprep.subr.mxu0 0.0
        %484 = vmatpush1.msra.mxu0 %v338
        %485 = vmatprep.subr.mxu0 0.0
        %486 = vmatpush1.msra.mxu0 %v339
        %487 = vmatprep.subr.mxu0 0.0
        %488 = vmatpush1.msra.mxu0 %v340
        %489 = vmatprep.subr.mxu0 0.0
        %490 = vmatpush1.msra.mxu0 0.0
        %491 = vmatprep.subr.mxu0 0.0
        %492 = vmatpush1.msra.mxu0 0.0
        %493 = vmatprep.subr.mxu0 0.0
        %494 = vmatpush1.msra.mxu0 0.0
        %495 = vmatprep.subr.mxu0 0.0
        %496 = vmatpush1.msra.mxu0 0.0
        %497 = vmatprep.subr.mxu0 0.0
        %498 = vmatpush1.msra.mxu0 0.0
        %499 = vmatprep.subr.mxu0 0.0
        %500 = vmatpush1.msra.mxu0 0.0
        %501 = vmatprep.subr.mxu0 0.0
        %502 = vmatpush1.msra.mxu0 0.0
        %503 = vmatprep.subr.mxu0 0.0
        %504 = vmatpush1.msra.mxu0 0.0
        %505 = vmatprep.subr.mxu0 0.0
        %506 = vmatpush1.msra.mxu0 0.0
        %507 = vmatprep.subr.mxu0 0.0
        %508 = vmatpush1.msra.mxu0 0.0
        %509 = vmatprep.subr.mxu0 0.0
        %510 = vmatpush1.msra.mxu0 0.0
        %511 = vmatprep.subr.mxu0 0.0
        %512 = vmatpush1.msra.mxu0 0.0
        %513 = vmatprep.subr.mxu0 0.0
        %514 = vmatpush1.msra.mxu0 0.0
        %515 = vmatprep.subr.mxu0 0.0
        %516 = vmatpush1.msra.mxu0 0.0
        %517 = vmatprep.subr.mxu0 0.0
        %518 = vmatpush1.msra.mxu0 0.0
        %519 = vmatprep.subr.mxu0 0.0
        %520 = vmatpush1.msra.mxu0 0.0
        %521 = vmatprep.mubr.f32.mxu0 0.0
        %522 = vmatmul.mubr.f32.gmra.mrb[0].mxu0 %v454
        %v523 = vpop.f32.mrb[0].mxu0
        %v524 = vadd.f32 %v456, %v523
        %v525 = vpop.f32.mrb[0].mxu0
        %526 = vdwg.mxu0
        %v527 = vmul.f32 %v324, %v438
        %v528 = vxor.u32 %v524, 2147483648
        %v529 = vmul.f32 %v528, 1.442695
        %v530 = vpow.pop %v529
        %v531 = vadd.f32 %v530, 1.0
        %v532 = vrcp.pop %v531
        %v533 = vmul.f32 1.0, %v532
        %v534 = vmul.f32 %v320, %v533
        %v535 = vadd.f32 %v527, %v534
        %s536 = scalar_lea.vmem %s266, 8 [#allocation11]
        %537 = vst [vmem:[%s536] sm:$0xff] %v535
        %v538 = vmul.f32 %v304, %v447
        %v539 = vadd.f32 %v300, %v538
        %v540 = vsub.f32 1.0, %v447
        %v541 = vmul.f32 %v308, %v540
        %v542 = vmul.f32 %v541, %v535
        %v543 = vadd.f32 %v539, %v542
        %v544 = vmax.f32 %v308, %v543
        %v545 = vmin.f32 %v544, 1.0
        %v546 = vmul.f32 %v316, %v452
        %v547 = vadd.f32 %v312, %v546
        %v548 = vmul.f32 %v545, %v452
        %v549 = vmul.f32 %v548, %v535
        %v550 = vsub.f32 %v547, %v549
        %v551 = vmul.f32 %v545, %v550
        %v552 = vmul.f32 %v551, %v535
        %s553 = scalar_lea.vmem %s236, 16 [#allocation5]
        %v554 = vld [vmem:[%s553] sm:$0xff]
        %555 = vmatprep.subr.mxu0 0.0
        %556 = vmatpush1.msra.mxu0 %v325
        %557 = vmatprep.subr.mxu0 0.0
        %558 = vmatpush1.msra.mxu0 %v326
        %559 = vmatprep.subr.mxu0 0.0
        %560 = vmatpush1.msra.mxu0 %v327
        %561 = vmatprep.subr.mxu0 0.0
        %562 = vmatpush1.msra.mxu0 %v328
        %563 = vmatprep.subr.mxu0 0.0
        %564 = vmatpush1.msra.mxu0 %v329
        %565 = vmatprep.subr.mxu0 0.0
        %566 = vmatpush1.msra.mxu0 %v330
        %567 = vmatprep.subr.mxu0 0.0
        %568 = vmatpush1.msra.mxu0 %v331
        %569 = vmatprep.subr.mxu0 0.0
        %570 = vmatpush1.msra.mxu0 %v332
        %571 = vmatprep.subr.mxu0 0.0
        %572 = vmatpush1.msra.mxu0 %v333
        %573 = vmatprep.subr.mxu0 0.0
        %574 = vmatpush1.msra.mxu0 %v334
        %575 = vmatprep.subr.mxu0 0.0
        %576 = vmatpush1.msra.mxu0 %v335
        %577 = vmatprep.subr.mxu0 0.0
        %578 = vmatpush1.msra.mxu0 %v336
        %579 = vmatprep.subr.mxu0 0.0
        %580 = vmatpush1.msra.mxu0 %v337
        %581 = vmatprep.subr.mxu0 0.0
        %582 = vmatpush1.msra.mxu0 %v338
        %583 = vmatprep.subr.mxu0 0.0
        %584 = vmatpush1.msra.mxu0 %v339
        %585 = vmatprep.subr.mxu0 0.0
        %586 = vmatpush1.msra.mxu0 %v340
        %587 = vmatprep.subr.mxu0 0.0
        %588 = vmatpush1.msra.mxu0 0.0
        %589 = vmatprep.subr.mxu0 0.0
        %590 = vmatpush1.msra.mxu0 0.0
        %591 = vmatprep.subr.mxu0 0.0
        %592 = vmatpush1.msra.mxu0 0.0
        %593 = vmatprep.subr.mxu0 0.0
        %594 = vmatpush1.msra.mxu0 0.0
        %595 = vmatprep.subr.mxu0 0.0
        %596 = vmatpush1.msra.mxu0 0.0
        %597 = vmatprep.subr.mxu0 0.0
        %598 = vmatpush1.msra.mxu0 0.0
        %599 = vmatprep.subr.mxu0 0.0
        %600 = vmatpush1.msra.mxu0 0.0
        %601 = vmatprep.subr.mxu0 0.0
        %602 = vmatpush1.msra.mxu0 0.0
        %603 = vmatprep.subr.mxu0 0.0
        %604 = vmatpush1.msra.mxu0 0.0
        %605 = vmatprep.subr.mxu0 0.0
        %606 = vmatpush1.msra.mxu0 0.0
        %607 = vmatprep.subr.mxu0 0.0
        %608 = vmatpush1.msra.mxu0 0.0
        %609 = vmatprep.subr.mxu0 0.0
        %610 = vmatpush1.msra.mxu0 0.0
        %611 = vmatprep.subr.mxu0 0.0
        %612 = vmatpush1.msra.mxu0 0.0
        %613 = vmatprep.subr.mxu0 0.0
        %614 = vmatpush1.msra.mxu0 0.0
        %615 = vmatprep.subr.mxu0 0.0
        %616 = vmatpush1.msra.mxu0 0.0
        %617 = vmatprep.subr.mxu0 0.0
        %618 = vmatpush1.msra.mxu0 0.0
        %619 = vmatprep.mubr.f32.mxu0 0.0
        %620 = vmatmul.mubr.f32.gmra.mrb[0].mxu0 %v552
        %v621 = vpop.f32.mrb[0].mxu0
        %v622 = vadd.f32 %v554, %v621
        %v623 = vpop.f32.mrb[0].mxu0
        %624 = vdwg.mxu0
        %v625 = vmul.f32 %v324, %v535
        %v626 = vxor.u32 %v622, 2147483648
        %v627 = vmul.f32 %v626, 1.442695
        %v628 = vpow.pop %v627
        %v629 = vadd.f32 %v628, 1.0
        %v630 = vrcp.pop %v629
        %v631 = vmul.f32 1.0, %v630
        %v632 = vmul.f32 %v320, %v631
        %v633 = vadd.f32 %v625, %v632
        %s634 = scalar_lea.vmem %s266, 16 [#allocation11]
        %635 = vst [vmem:[%s634] sm:$0xff] %v633
        %v636 = vmul.f32 %v304, %v545
        %v637 = vadd.f32 %v300, %v636
        %v638 = vsub.f32 1.0, %v545
        %v639 = vmul.f32 %v308, %v638
        %v640 = vmul.f32 %v639, %v633
        %v641 = vadd.f32 %v637, %v640
        %v642 = vmax.f32 %v308, %v641
        %v643 = vmin.f32 %v642, 1.0
        %v644 = vmul.f32 %v316, %v550
        %v645 = vadd.f32 %v312, %v644
        %v646 = vmul.f32 %v643, %v550
        %v647 = vmul.f32 %v646, %v633
        %v648 = vsub.f32 %v645, %v647
        %v649 = vmul.f32 %v643, %v648
        %v650 = vmul.f32 %v649, %v633
        %s651 = scalar_lea.vmem %s236, 24 [#allocation5]
        %v652 = vld [vmem:[%s651] sm:$0xff]
        %653 = vmatprep.subr.mxu0 0.0
        %654 = vmatpush1.msra.mxu0 %v325
        %655 = vmatprep.subr.mxu0 0.0
        %656 = vmatpush1.msra.mxu0 %v326
        %657 = vmatprep.subr.mxu0 0.0
        %658 = vmatpush1.msra.mxu0 %v327
        %659 = vmatprep.subr.mxu0 0.0
        %660 = vmatpush1.msra.mxu0 %v328
        %661 = vmatprep.subr.mxu0 0.0
        %662 = vmatpush1.msra.mxu0 %v329
        %663 = vmatprep.subr.mxu0 0.0
        %664 = vmatpush1.msra.mxu0 %v330
        %665 = vmatprep.subr.mxu0 0.0
        %666 = vmatpush1.msra.mxu0 %v331
        %667 = vmatprep.subr.mxu0 0.0
        %668 = vmatpush1.msra.mxu0 %v332
        %669 = vmatprep.subr.mxu0 0.0
        %670 = vmatpush1.msra.mxu0 %v333
        %671 = vmatprep.subr.mxu0 0.0
        %672 = vmatpush1.msra.mxu0 %v334
        %673 = vmatprep.subr.mxu0 0.0
        %674 = vmatpush1.msra.mxu0 %v335
        %675 = vmatprep.subr.mxu0 0.0
        %676 = vmatpush1.msra.mxu0 %v336
        %677 = vmatprep.subr.mxu0 0.0
        %678 = vmatpush1.msra.mxu0 %v337
        %679 = vmatprep.subr.mxu0 0.0
        %680 = vmatpush1.msra.mxu0 %v338
        %681 = vmatprep.subr.mxu0 0.0
        %682 = vmatpush1.msra.mxu0 %v339
        %683 = vmatprep.subr.mxu0 0.0
        %684 = vmatpush1.msra.mxu0 %v340
        %685 = vmatprep.subr.mxu0 0.0
        %686 = vmatpush1.msra.mxu0 0.0
        %687 = vmatprep.subr.mxu0 0.0
        %688 = vmatpush1.msra.mxu0 0.0
        %689 = vmatprep.subr.mxu0 0.0
        %690 = vmatpush1.msra.mxu0 0.0
        %691 = vmatprep.subr.mxu0 0.0
        %692 = vmatpush1.msra.mxu0 0.0
        %693 = vmatprep.subr.mxu0 0.0
        %694 = vmatpush1.msra.mxu0 0.0
        %695 = vmatprep.subr.mxu0 0.0
        %696 = vmatpush1.msra.mxu0 0.0
        %697 = vmatprep.subr.mxu0 0.0
        %698 = vmatpush1.msra.mxu0 0.0
        %699 = vmatprep.subr.mxu0 0.0
        %700 = vmatpush1.msra.mxu0 0.0
        %701 = vmatprep.subr.mxu0 0.0
        %702 = vmatpush1.msra.mxu0 0.0
        %703 = vmatprep.subr.mxu0 0.0
        %704 = vmatpush1.msra.mxu0 0.0
        %705 = vmatprep.subr.mxu0 0.0
        %706 = vmatpush1.msra.mxu0 0.0
        %707 = vmatprep.subr.mxu0 0.0
        %708 = vmatpush1.msra.mxu0 0.0
        %709 = vmatprep.subr.mxu0 0.0
        %710 = vmatpush1.msra.mxu0 0.0
        %711 = vmatprep.subr.mxu0 0.0
        %712 = vmatpush1.msra.mxu0 0.0
        %713 = vmatprep.subr.mxu0 0.0
        %714 = vmatpush1.msra.mxu0 0.0
        %715 = vmatprep.subr.mxu0 0.0
        %716 = vmatpush1.msra.mxu0 0.0
        %717 = vmatprep.mubr.f32.mxu0 0.0
        %718 = vmatmul.mubr.f32.gmra.mrb[0].mxu0 %v650
        %v719 = vpop.f32.mrb[0].mxu0
        %v720 = vadd.f32 %v652, %v719
        %v721 = vpop.f32.mrb[0].mxu0
        %722 = vdwg.mxu0
        %v723 = vmul.f32 %v324, %v633
        %v724 = vxor.u32 %v720, 2147483648
        %v725 = vmul.f32 %v724, 1.442695
        %v726 = vpow.pop %v725
        %v727 = vadd.f32 %v726, 1.0
        %v728 = vrcp.pop %v727
        %v729 = vmul.f32 1.0, %v728
        %v730 = vmul.f32 %v320, %v729
        %v731 = vadd.f32 %v723, %v730
        %s732 = scalar_lea.vmem %s266, 24 [#allocation11]
        %733 = vst [vmem:[%s732] sm:$0xff] %v731
        %v734 = vmul.f32 %v304, %v643
        %v735 = vadd.f32 %v300, %v734
        %v736 = vsub.f32 1.0, %v643
        %v737 = vmul.f32 %v308, %v736
        %v738 = vmul.f32 %v737, %v731
        %v739 = vadd.f32 %v735, %v738
        %v740 = vmax.f32 %v308, %v739
        %v741 = vmin.f32 %v740, 1.0
        %v742 = vmul.f32 %v316, %v648
        %v743 = vadd.f32 %v312, %v742
        %v744 = vmul.f32 %v741, %v648
        %v745 = vmul.f32 %v744, %v731
        %v746 = vsub.f32 %v743, %v745
        %v747 = vmul.f32 %v741, %v746
        %v748 = vmul.f32 %v747, %v731
        %s749 = scalar_lea.vmem %s236, 32 [#allocation5]
        %v750 = vld [vmem:[%s749] sm:$0xff]
        %751 = vmatprep.subr.mxu0 0.0
        %752 = vmatpush1.msra.mxu0 %v325
        %753 = vmatprep.subr.mxu0 0.0
        %754 = vmatpush1.msra.mxu0 %v326
        %755 = vmatprep.subr.mxu0 0.0
        %756 = vmatpush1.msra.mxu0 %v327
        %757 = vmatprep.subr.mxu0 0.0
        %758 = vmatpush1.msra.mxu0 %v328
        %759 = vmatprep.subr.mxu0 0.0
        %760 = vmatpush1.msra.mxu0 %v329
        %761 = vmatprep.subr.mxu0 0.0
        %762 = vmatpush1.msra.mxu0 %v330
        %763 = vmatprep.subr.mxu0 0.0
        %764 = vmatpush1.msra.mxu0 %v331
        %765 = vmatprep.subr.mxu0 0.0
        %766 = vmatpush1.msra.mxu0 %v332
        %767 = vmatprep.subr.mxu0 0.0
        %768 = vmatpush1.msra.mxu0 %v333
        %769 = vmatprep.subr.mxu0 0.0
        %770 = vmatpush1.msra.mxu0 %v334
        %771 = vmatprep.subr.mxu0 0.0
        %772 = vmatpush1.msra.mxu0 %v335
        %773 = vmatprep.subr.mxu0 0.0
        %774 = vmatpush1.msra.mxu0 %v336
        %775 = vmatprep.subr.mxu0 0.0
        %776 = vmatpush1.msra.mxu0 %v337
        %777 = vmatprep.subr.mxu0 0.0
        %778 = vmatpush1.msra.mxu0 %v338
        %779 = vmatprep.subr.mxu0 0.0
        %780 = vmatpush1.msra.mxu0 %v339
        %781 = vmatprep.subr.mxu0 0.0
        %782 = vmatpush1.msra.mxu0 %v340
        %783 = vmatprep.subr.mxu0 0.0
        %784 = vmatpush1.msra.mxu0 0.0
        %785 = vmatprep.subr.mxu0 0.0
        %786 = vmatpush1.msra.mxu0 0.0
        %787 = vmatprep.subr.mxu0 0.0
        %788 = vmatpush1.msra.mxu0 0.0
        %789 = vmatprep.subr.mxu0 0.0
        %790 = vmatpush1.msra.mxu0 0.0
        %791 = vmatprep.subr.mxu0 0.0
        %792 = vmatpush1.msra.mxu0 0.0
        %793 = vmatprep.subr.mxu0 0.0
        %794 = vmatpush1.msra.mxu0 0.0
        %795 = vmatprep.subr.mxu0 0.0
        %796 = vmatpush1.msra.mxu0 0.0
        %797 = vmatprep.subr.mxu0 0.0
        %798 = vmatpush1.msra.mxu0 0.0
        %799 = vmatprep.subr.mxu0 0.0
        %800 = vmatpush1.msra.mxu0 0.0
        %801 = vmatprep.subr.mxu0 0.0
        %802 = vmatpush1.msra.mxu0 0.0
        %803 = vmatprep.subr.mxu0 0.0
        %804 = vmatpush1.msra.mxu0 0.0
        %805 = vmatprep.subr.mxu0 0.0
        %806 = vmatpush1.msra.mxu0 0.0
        %807 = vmatprep.subr.mxu0 0.0
        %808 = vmatpush1.msra.mxu0 0.0
        %809 = vmatprep.subr.mxu0 0.0
        %810 = vmatpush1.msra.mxu0 0.0
        %811 = vmatprep.subr.mxu0 0.0
        %812 = vmatpush1.msra.mxu0 0.0
        %813 = vmatprep.subr.mxu0 0.0
        %814 = vmatpush1.msra.mxu0 0.0
        %815 = vmatprep.mubr.f32.mxu0 0.0
        %816 = vmatmul.mubr.f32.gmra.mrb[0].mxu0 %v748
        %v817 = vpop.f32.mrb[0].mxu0
        %v818 = vadd.f32 %v750, %v817
        %v819 = vpop.f32.mrb[0].mxu0
        %820 = vdwg.mxu0
        %v821 = vmul.f32 %v324, %v731
        %v822 = vxor.u32 %v818, 2147483648
        %v823 = vmul.f32 %v822, 1.442695
        %v824 = vpow.pop %v823
        %v825 = vadd.f32 %v824, 1.0
        %v826 = vrcp.pop %v825
        %v827 = vmul.f32 1.0, %v826
        %v828 = vmul.f32 %v320, %v827
        %v829 = vadd.f32 %v821, %v828
        %s830 = scalar_lea.vmem %s266, 32 [#allocation11]
        %831 = vst [vmem:[%s830] sm:$0xff] %v829
        %v832 = vmul.f32 %v304, %v741
        %v833 = vadd.f32 %v300, %v832
        %v834 = vsub.f32 1.0, %v741
        %v835 = vmul.f32 %v308, %v834
        %v836 = vmul.f32 %v835, %v829
        %v837 = vadd.f32 %v833, %v836
        %v838 = vmax.f32 %v308, %v837
        %v839 = vmin.f32 %v838, 1.0
        %v840 = vmul.f32 %v316, %v746
        %v841 = vadd.f32 %v312, %v840
        %v842 = vmul.f32 %v839, %v746
        %v843 = vmul.f32 %v842, %v829
        %v844 = vsub.f32 %v841, %v843
        %v845 = vmul.f32 %v839, %v844
        %v846 = vmul.f32 %v845, %v829
        %s847 = scalar_lea.vmem %s236, 40 [#allocation5]
        %v848 = vld [vmem:[%s847] sm:$0xff]
        %849 = vmatprep.subr.mxu0 0.0
        %850 = vmatpush1.msra.mxu0 %v325
        %851 = vmatprep.subr.mxu0 0.0
        %852 = vmatpush1.msra.mxu0 %v326
        %853 = vmatprep.subr.mxu0 0.0
        %854 = vmatpush1.msra.mxu0 %v327
        %855 = vmatprep.subr.mxu0 0.0
        %856 = vmatpush1.msra.mxu0 %v328
        %857 = vmatprep.subr.mxu0 0.0
        %858 = vmatpush1.msra.mxu0 %v329
        %859 = vmatprep.subr.mxu0 0.0
        %860 = vmatpush1.msra.mxu0 %v330
        %861 = vmatprep.subr.mxu0 0.0
        %862 = vmatpush1.msra.mxu0 %v331
        %863 = vmatprep.subr.mxu0 0.0
        %864 = vmatpush1.msra.mxu0 %v332
        %865 = vmatprep.subr.mxu0 0.0
        %866 = vmatpush1.msra.mxu0 %v333
        %867 = vmatprep.subr.mxu0 0.0
        %868 = vmatpush1.msra.mxu0 %v334
        %869 = vmatprep.subr.mxu0 0.0
        %870 = vmatpush1.msra.mxu0 %v335
        %871 = vmatprep.subr.mxu0 0.0
        %872 = vmatpush1.msra.mxu0 %v336
        %873 = vmatprep.subr.mxu0 0.0
        %874 = vmatpush1.msra.mxu0 %v337
        %875 = vmatprep.subr.mxu0 0.0
        %876 = vmatpush1.msra.mxu0 %v338
        %877 = vmatprep.subr.mxu0 0.0
        %878 = vmatpush1.msra.mxu0 %v339
        %879 = vmatprep.subr.mxu0 0.0
        %880 = vmatpush1.msra.mxu0 %v340
        %881 = vmatprep.subr.mxu0 0.0
        %882 = vmatpush1.msra.mxu0 0.0
        %883 = vmatprep.subr.mxu0 0.0
        %884 = vmatpush1.msra.mxu0 0.0
        %885 = vmatprep.subr.mxu0 0.0
        %886 = vmatpush1.msra.mxu0 0.0
        %887 = vmatprep.subr.mxu0 0.0
        %888 = vmatpush1.msra.mxu0 0.0
        %889 = vmatprep.subr.mxu0 0.0
        %890 = vmatpush1.msra.mxu0 0.0
        %891 = vmatprep.subr.mxu0 0.0
        %892 = vmatpush1.msra.mxu0 0.0
        %893 = vmatprep.subr.mxu0 0.0
        %894 = vmatpush1.msra.mxu0 0.0
        %895 = vmatprep.subr.mxu0 0.0
        %896 = vmatpush1.msra.mxu0 0.0
        %897 = vmatprep.subr.mxu0 0.0
        %898 = vmatpush1.msra.mxu0 0.0
        %899 = vmatprep.subr.mxu0 0.0
        %900 = vmatpush1.msra.mxu0 0.0
        %901 = vmatprep.subr.mxu0 0.0
        %902 = vmatpush1.msra.mxu0 0.0
        %903 = vmatprep.subr.mxu0 0.0
        %904 = vmatpush1.msra.mxu0 0.0
        %905 = vmatprep.subr.mxu0 0.0
        %906 = vmatpush1.msra.mxu0 0.0
        %907 = vmatprep.subr.mxu0 0.0
        %908 = vmatpush1.msra.mxu0 0.0
        %909 = vmatprep.subr.mxu0 0.0
        %910 = vmatpush1.msra.mxu0 0.0
        %911 = vmatprep.subr.mxu0 0.0
        %912 = vmatpush1.msra.mxu0 0.0
        %913 = vmatprep.mubr.f32.mxu0 0.0
        %914 = vmatmul.mubr.f32.gmra.mrb[0].mxu0 %v846
        %v915 = vpop.f32.mrb[0].mxu0
        %v916 = vadd.f32 %v848, %v915
        %v917 = vpop.f32.mrb[0].mxu0
        %918 = vdwg.mxu0
        %v919 = vmul.f32 %v324, %v829
        %v920 = vxor.u32 %v916, 2147483648
        %v921 = vmul.f32 %v920, 1.442695
        %v922 = vpow.pop %v921
        %v923 = vadd.f32 %v922, 1.0
        %v924 = vrcp.pop %v923
        %v925 = vmul.f32 1.0, %v924
        %v926 = vmul.f32 %v320, %v925
        %v927 = vadd.f32 %v919, %v926
        %s928 = scalar_lea.vmem %s266, 40 [#allocation11]
        %929 = vst [vmem:[%s928] sm:$0xff] %v927
        %v930 = vmul.f32 %v304, %v839
        %v931 = vadd.f32 %v300, %v930
        %v932 = vsub.f32 1.0, %v839
        %v933 = vmul.f32 %v308, %v932
        %v934 = vmul.f32 %v933, %v927
        %v935 = vadd.f32 %v931, %v934
        %v936 = vmax.f32 %v308, %v935
        %v937 = vmin.f32 %v936, 1.0
        %v938 = vmul.f32 %v316, %v844
        %v939 = vadd.f32 %v312, %v938
        %v940 = vmul.f32 %v937, %v844
        %v941 = vmul.f32 %v940, %v927
        %v942 = vsub.f32 %v939, %v941
        %v943 = vmul.f32 %v937, %v942
        %v944 = vmul.f32 %v943, %v927
        %s945 = scalar_lea.vmem %s236, 48 [#allocation5]
        %v946 = vld [vmem:[%s945] sm:$0xff]
        %947 = vmatprep.subr.mxu0 0.0
        %948 = vmatpush1.msra.mxu0 %v325
        %949 = vmatprep.subr.mxu0 0.0
        %950 = vmatpush1.msra.mxu0 %v326
        %951 = vmatprep.subr.mxu0 0.0
        %952 = vmatpush1.msra.mxu0 %v327
        %953 = vmatprep.subr.mxu0 0.0
        %954 = vmatpush1.msra.mxu0 %v328
        %955 = vmatprep.subr.mxu0 0.0
        %956 = vmatpush1.msra.mxu0 %v329
        %957 = vmatprep.subr.mxu0 0.0
        %958 = vmatpush1.msra.mxu0 %v330
        %959 = vmatprep.subr.mxu0 0.0
        %960 = vmatpush1.msra.mxu0 %v331
        %961 = vmatprep.subr.mxu0 0.0
        %962 = vmatpush1.msra.mxu0 %v332
        %963 = vmatprep.subr.mxu0 0.0
        %964 = vmatpush1.msra.mxu0 %v333
        %965 = vmatprep.subr.mxu0 0.0
        %966 = vmatpush1.msra.mxu0 %v334
        %967 = vmatprep.subr.mxu0 0.0
        %968 = vmatpush1.msra.mxu0 %v335
        %969 = vmatprep.subr.mxu0 0.0
        %970 = vmatpush1.msra.mxu0 %v336
        %971 = vmatprep.subr.mxu0 0.0
        %972 = vmatpush1.msra.mxu0 %v337
        %973 = vmatprep.subr.mxu0 0.0
        %974 = vmatpush1.msra.mxu0 %v338
        %975 = vmatprep.subr.mxu0 0.0
        %976 = vmatpush1.msra.mxu0 %v339
        %977 = vmatprep.subr.mxu0 0.0
        %978 = vmatpush1.msra.mxu0 %v340
        %979 = vmatprep.subr.mxu0 0.0
        %980 = vmatpush1.msra.mxu0 0.0
        %981 = vmatprep.subr.mxu0 0.0
        %982 = vmatpush1.msra.mxu0 0.0
        %983 = vmatprep.subr.mxu0 0.0
        %984 = vmatpush1.msra.mxu0 0.0
        %985 = vmatprep.subr.mxu0 0.0
        %986 = vmatpush1.msra.mxu0 0.0
        %987 = vmatprep.subr.mxu0 0.0
        %988 = vmatpush1.msra.mxu0 0.0
        %989 = vmatprep.subr.mxu0 0.0
        %990 = vmatpush1.msra.mxu0 0.0
        %991 = vmatprep.subr.mxu0 0.0
        %992 = vmatpush1.msra.mxu0 0.0
        %993 = vmatprep.subr.mxu0 0.0
        %994 = vmatpush1.msra.mxu0 0.0
        %995 = vmatprep.subr.mxu0 0.0
        %996 = vmatpush1.msra.mxu0 0.0
        %997 = vmatprep.subr.mxu0 0.0
        %998 = vmatpush1.msra.mxu0 0.0
        %999 = vmatprep.subr.mxu0 0.0
        %1000 = vmatpush1.msra.mxu0 0.0
        %1001 = vmatprep.subr.mxu0 0.0
        %1002 = vmatpush1.msra.mxu0 0.0
        %1003 = vmatprep.subr.mxu0 0.0
        %1004 = vmatpush1.msra.mxu0 0.0
        %1005 = vmatprep.subr.mxu0 0.0
        %1006 = vmatpush1.msra.mxu0 0.0
        %1007 = vmatprep.subr.mxu0 0.0
        %1008 = vmatpush1.msra.mxu0 0.0
        %1009 = vmatprep.subr.mxu0 0.0
        %1010 = vmatpush1.msra.mxu0 0.0
        %1011 = vmatprep.mubr.f32.mxu0 0.0
        %1012 = vmatmul.mubr.f32.gmra.mrb[0].mxu0 %v944
        %v1013 = vpop.f32.mrb[0].mxu0
        %v1014 = vadd.f32 %v946, %v1013
        %v1015 = vpop.f32.mrb[0].mxu0
        %1016 = vdwg.mxu0
        %v1017 = vmul.f32 %v324, %v927
        %v1018 = vxor.u32 %v1014, 2147483648
        %v1019 = vmul.f32 %v1018, 1.442695
        %v1020 = vpow.pop %v1019
        %v1021 = vadd.f32 %v1020, 1.0
        %v1022 = vrcp.pop %v1021
        %v1023 = vmul.f32 1.0, %v1022
        %v1024 = vmul.f32 %v320, %v1023
        %v1025 = vadd.f32 %v1017, %v1024
        %s1026 = scalar_lea.vmem %s266, 48 [#allocation11]
        %1027 = vst [vmem:[%s1026] sm:$0xff] %v1025
        %v1028 = vmul.f32 %v304, %v937
        %v1029 = vadd.f32 %v300, %v1028
        %v1030 = vsub.f32 1.0, %v937
        %v1031 = vmul.f32 %v308, %v1030
        %v1032 = vmul.f32 %v1031, %v1025
        %v1033 = vadd.f32 %v1029, %v1032
        %v1034 = vmax.f32 %v308, %v1033
        %v1035 = vmin.f32 %v1034, 1.0
        %v1036 = vmul.f32 %v316, %v942
        %v1037 = vadd.f32 %v312, %v1036
        %v1038 = vmul.f32 %v1035, %v942
        %v1039 = vmul.f32 %v1038, %v1025
        %v1040 = vsub.f32 %v1037, %v1039
        %v1041 = vmul.f32 %v1035, %v1040
        %v1042 = vmul.f32 %v1041, %v1025
        %s1043 = scalar_lea.vmem %s236, 56 [#allocation5]
        %v1044 = vld [vmem:[%s1043] sm:$0xff]
        %1045 = vmatprep.subr.mxu0 0.0
        %1046 = vmatpush1.msra.mxu0 %v325
        %1047 = vmatprep.subr.mxu0 0.0
        %1048 = vmatpush1.msra.mxu0 %v326
        %1049 = vmatprep.subr.mxu0 0.0
        %1050 = vmatpush1.msra.mxu0 %v327
        %1051 = vmatprep.subr.mxu0 0.0
        %1052 = vmatpush1.msra.mxu0 %v328
        %1053 = vmatprep.subr.mxu0 0.0
        %1054 = vmatpush1.msra.mxu0 %v329
        %1055 = vmatprep.subr.mxu0 0.0
        %1056 = vmatpush1.msra.mxu0 %v330
        %1057 = vmatprep.subr.mxu0 0.0
        %1058 = vmatpush1.msra.mxu0 %v331
        %1059 = vmatprep.subr.mxu0 0.0
        %1060 = vmatpush1.msra.mxu0 %v332
        %1061 = vmatprep.subr.mxu0 0.0
        %1062 = vmatpush1.msra.mxu0 %v333
        %1063 = vmatprep.subr.mxu0 0.0
        %1064 = vmatpush1.msra.mxu0 %v334
        %1065 = vmatprep.subr.mxu0 0.0
        %1066 = vmatpush1.msra.mxu0 %v335
        %1067 = vmatprep.subr.mxu0 0.0
        %1068 = vmatpush1.msra.mxu0 %v336
        %1069 = vmatprep.subr.mxu0 0.0
        %1070 = vmatpush1.msra.mxu0 %v337
        %1071 = vmatprep.subr.mxu0 0.0
        %1072 = vmatpush1.msra.mxu0 %v338
        %1073 = vmatprep.subr.mxu0 0.0
        %1074 = vmatpush1.msra.mxu0 %v339
        %1075 = vmatprep.subr.mxu0 0.0
        %1076 = vmatpush1.msra.mxu0 %v340
        %1077 = vmatprep.subr.mxu0 0.0
        %1078 = vmatpush1.msra.mxu0 0.0
        %1079 = vmatprep.subr.mxu0 0.0
        %1080 = vmatpush1.msra.mxu0 0.0
        %1081 = vmatprep.subr.mxu0 0.0
        %1082 = vmatpush1.msra.mxu0 0.0
        %1083 = vmatprep.subr.mxu0 0.0
        %1084 = vmatpush1.msra.mxu0 0.0
        %1085 = vmatprep.subr.mxu0 0.0
        %1086 = vmatpush1.msra.mxu0 0.0
        %1087 = vmatprep.subr.mxu0 0.0
        %1088 = vmatpush1.msra.mxu0 0.0
        %1089 = vmatprep.subr.mxu0 0.0
        %1090 = vmatpush1.msra.mxu0 0.0
        %1091 = vmatprep.subr.mxu0 0.0
        %1092 = vmatpush1.msra.mxu0 0.0
        %1093 = vmatprep.subr.mxu0 0.0
        %1094 = vmatpush1.msra.mxu0 0.0
        %1095 = vmatprep.subr.mxu0 0.0
        %1096 = vmatpush1.msra.mxu0 0.0
        %1097 = vmatprep.subr.mxu0 0.0
        %1098 = vmatpush1.msra.mxu0 0.0
        %1099 = vmatprep.subr.mxu0 0.0
        %1100 = vmatpush1.msra.mxu0 0.0
        %1101 = vmatprep.subr.mxu0 0.0
        %1102 = vmatpush1.msra.mxu0 0.0
        %1103 = vmatprep.subr.mxu0 0.0
        %1104 = vmatpush1.msra.mxu0 0.0
        %1105 = vmatprep.subr.mxu0 0.0
        %1106 = vmatpush1.msra.mxu0 0.0
        %1107 = vmatprep.subr.mxu0 0.0
        %1108 = vmatpush1.msra.mxu0 0.0
        %1109 = vmatprep.mubr.f32.mxu0 0.0
        %1110 = vmatmul.mubr.f32.gmra.mrb[0].mxu0 %v1042
        %v1111 = vpop.f32.mrb[0].mxu0
        %v1112 = vadd.f32 %v1044, %v1111
        %v1113 = vpop.f32.mrb[0].mxu0
        %1114 = vdwg.mxu0
        %v1115 = vmul.f32 %v324, %v1025
        %v1116 = vxor.u32 %v1112, 2147483648
        %v1117 = vmul.f32 %v1116, 1.442695
        %v1118 = vpow.pop %v1117
        %v1119 = vadd.f32 %v1118, 1.0
        %v1120 = vrcp.pop %v1119
        %v1121 = vmul.f32 1.0, %v1120
        %v1122 = vmul.f32 %v320, %v1121
        %v1123 = vadd.f32 %v1115, %v1122
        %s1124 = scalar_lea.vmem %s266, 56 [#allocation11]
        %1125 = vst [vmem:[%s1124] sm:$0xff] %v1123
        %1126 = vst [vmem:[#allocation2] sm:$0xff] %v1123
        %1127 = vst [vmem:[#allocation3] sm:$0xff] %v1035
        %1128 = vst [vmem:[#allocation4] sm:$0xff] %v1040
        %p1129 = scmp.eq.s32.totalorder %s31, 1
        // Predicated region
        $region49: #{tpu_custom_call.1} parent=31 // pred_check
          %p1130 = pneg %p1129
        $region50: #{tpu_custom_call.1} parent=31 // pred_check_branch
          %1132 = sbr.rel (%p1130) target = $region52
        $region51: #{tpu_custom_call.1} parent=31 // pred_region
          %1133 = vst [vmem:[%s273] sm:$0xff] %v1035
          %s1134 = scalar_lea.vmem %s273, 8 [#allocation12]
          %1135 = vst [vmem:[%s1134] sm:$0xff] %v1040
        $region52: #{tpu_custom_call.1} parent=31 // pred_fallthru
          _
        %s1136 = sand.u32 %s118, 1
        %s1137 = scalar_lea.sflag [#allocation7], %s1136
        %s1138 = sand.u32 %s118, 1
        %s1139 = smul.addr %s1138, 64
        %s1140 = scalar_lea.vmem [#allocation11], %s1139
        %s1141 = sand.u32 %s144, 1
        %s1142 = scalar_lea.sflag [#allocation13], %s1141
        %s1143 = sand.u32 %s144, 1
        %s1144 = smul.addr %s1143, 16
        %s1145 = scalar_lea.vmem [#allocation12], %s1144
        // Predicated region
        $region53: #{tpu_custom_call.1} parent=31 // pred_check
          %p1146 = pneg %p128
        $region54: #{tpu_custom_call.1} parent=31 // pred_check_branch
          %1148 = sbr.rel (%p1146) target = $region56
        $region55: #{tpu_custom_call.1} parent=31 // pred_region
          %s1149 = smul.u32 8, %s31
          %s1151 = ssub.s32 1024, 1024
          %1152 = vsyncadd %s1137, %s1151
          %s1153 = smul.addr %s1149, 2
          %s1154 = sadd.s32 %s30, %s1153
          %s1155 = smul.addr %s1154, 128
          %s1156 = scalar_lea.hbm %s3, %s1155
          %s1157 = sshll.u32 %s1140, 4
          %s1158 = int_to_ptr.vmem [resolvable:$true] %s1157
          %1163 = dma.vmem_to_hbm [thread:$0]  %s1158, 1024, %s1156, %s1137, 128, 256, 8
        $region56: #{tpu_custom_call.1} parent=31 // pred_fallthru
          _
        // Predicated region
        $region57: #{tpu_custom_call.1} parent=31 // pred_check
          %p1164 = pneg %p154
        $region58: #{tpu_custom_call.1} parent=31 // pred_check_branch
          %1166 = sbr.rel (%p1164) target = $region60
        $region59: #{tpu_custom_call.1} parent=31 // pred_region
          %s1168 = ssub.s32 256, 256
          %1169 = vsyncadd %s1142, %s1168
          %s1170 = smul.addr %s30, 128
          %s1171 = scalar_lea.hbm %s4, %s1170
          %s1172 = sshll.u32 %s1145, 4
          %s1173 = int_to_ptr.vmem [resolvable:$true] %s1172
          %1178 = dma.vmem_to_hbm [thread:$0]  %s1173, 256, %s1171, %s1142, 128, 256, 8
        $region60: #{tpu_custom_call.1} parent=31 // pred_fallthru
          _
      $region32: #{tpu_custom_call.1} parent=5 // pred_fallthru
        _
      %p1179 = scmp.le.s32.totalorder 2, %s21
      // Predicated region
      $region61: #{tpu_custom_call.1} parent=5 // pred_check
        %p1180 = pneg %p1179
      $region62: #{tpu_custom_call.1} parent=5 // pred_check_branch
        %1182 = sbr.rel (%p1180) target = $region64
      $region63: #{tpu_custom_call.1} parent=5 // pred_region
        %s1183 = ssub.s32 %s21, 2
        // Predicated region
        $region65: #{tpu_custom_call.1} parent=63 // pred_check
          %p1184 = pneg %p134
        $region66: #{tpu_custom_call.1} parent=63 // pred_check_branch
          %1186 = sbr.rel (%p1184) target = $region68
        $region67: #{tpu_custom_call.1} parent=63 // pred_region
          %s1187 = sand.u32 %s119, 1
          %s1188 = scalar_lea.sflag [#allocation7], %s1187
          %s1189 = sand.u32 %s119, 1
          %s1190 = smul.addr %s1189, 64
          %s1191 = scalar_lea.vmem [#allocation11], %s1190
          %1192 = dma.done %s1188, 1024
        $region68: #{tpu_custom_call.1} parent=63 // pred_fallthru
          _
        // Predicated region
        $region69: #{tpu_custom_call.1} parent=63 // pred_check
          %p1193 = pneg %p160
        $region70: #{tpu_custom_call.1} parent=63 // pred_check_branch
          %1195 = sbr.rel (%p1193) target = $region72
        $region71: #{tpu_custom_call.1} parent=63 // pred_region
          %s1196 = sand.u32 %s145, 1
          %s1197 = scalar_lea.sflag [#allocation13], %s1196
          %s1198 = sand.u32 %s145, 1
          %s1199 = smul.addr %s1198, 16
          %s1200 = scalar_lea.vmem [#allocation12], %s1199
          %1201 = dma.done %s1197, 256
        $region72: #{tpu_custom_call.1} parent=63 // pred_fallthru
          _
      $region64: #{tpu_custom_call.1} parent=5 // pred_fallthru
        _
    $region6: #{tpu_custom_call.1} parent=1 // loop_footer
      %s25 = sadd.s32 1, %s21
    $region7: #{tpu_custom_call.1} parent=1 // loop_footer_branch
      %20 = sbr.rel target = $region3
    $region8: #{tpu_custom_call.1} parent=1 // loop_exit
      _
    %1202 = vsyncpa [#allocation6], 1
    %s1203 = scalar_lea.sflag [#allocation6], 1
    %1204 = vsyncpa %s1203, 1
    %1205 = vsyncpa [#allocation9], 1
    %1206 = vsyncpa [#allocation7], 1
    %s1207 = scalar_lea.sflag [#allocation7], 1
    %1208 = vsyncpa %s1207, 1
    %1209 = vsyncpa [#allocation13], 1
    %s1210 = scalar_lea.sflag [#allocation13], 1
    %1211 = vsyncpa %s1210, 1

</llo_original>
